<compile_context>
chip_gen: v7x
topology: tpu7x:2x2x1
jax: 0.10.0
libtpu: 0.0.40
codegen_flags: <defaults>
</compile_context>

<pallas_src>
import jax
import jax.numpy as jnp
from jax.experimental import pallas as pl
from jax.experimental.pallas import tpu as pltpu


# --------------------------- per-tile compute helpers ------------------------

def _layer1(x, w1, b1):
    """Layer 1 (K=3) as three VPU broadcast-FMAs in channel-major layout.

    x:  (3, L)  f32   (points on lanes)
    w1: (64, 3) f32   (native Conv1d layout)
    b1: (64, 1) f32
    returns (64, L) f32, post-ReLU.
    """
    y = (w1[:, 0:1] * x[0:1, :]
         + w1[:, 1:2] * x[1:2, :]
         + w1[:, 2:3] * x[2:3, :]
         + b1)
    return jnp.maximum(y, 0.0)


def _mm_relu_bf16(w_ref, b_ref, h):
    """Channel-major 1x1 conv: dot(W (C_out,C_in) bf16, h (C_in,L) bf16) with
    f32 accumulation, bias add + ReLU in f32, activation carried in bf16."""
    y = jnp.dot(w_ref[...], h, preferred_element_type=jnp.float32) + b_ref[...]
    return jnp.maximum(y, 0.0).astype(jnp.bfloat16)


# ---------------------------------- kernels ----------------------------------

def template_kernel(x_ref,
                    w1, b1, w2, b2, w3, b3, w4, b4, w5, b5,
                    out_ref):
    """tag == 'template': five chained 1x1-conv + ReLU layers, channel-major.

    Only the final (emb, tn) activation goes to HBM (already in (B, emb, N)
    layout, no transpose); the source pass recomputes the chain in the fused
    kernel, so intermediates never leave VMEM."""
    x = x_ref[0]                                                # (3, tn) f32
    h = _layer1(x, w1[...], b1[...]).astype(jnp.bfloat16)       # (64, tn)
    for w_ref, b_ref in ((w2, b2), (w3, b3), (w4, b4), (w5, b5)):
        h = _mm_relu_bf16(w_ref, b_ref, h)                      # (C_out, tn)
    out_ref[0] = h.astype(out_ref.dtype)                        # (emb, tn)


def fused_source_kernel(xt_ref, xs_ref,
                        w1, b1, w2, b2, w3, b3, w4, b4, w5, b5,
                        out_ref):
    """tag == 'source': template chain recomputed tile-resident in VMEM; both
    branches are stacked along the lane (tn) dim so every layer is a single
    MXU matmul; fusion (element-wise max, see module-level TODO) after every
    source layer."""
    tn = out_ref.shape[-1]
    # Stack [template ; source] along lanes: (3, 2*tn) f32.
    x = jnp.concatenate([xt_ref[0], xs_ref[0]], axis=-1)

    y = _layer1(x, w1[...], b1[...]).astype(jnp.bfloat16)       # (64, 2*tn)
    t = y[:, :tn]
    s = jnp.maximum(y[:, tn:], t)

    for w_ref, b_ref in ((w2, b2), (w3, b3), (w4, b4), (w5, b5)):
        h = jnp.concatenate([t, s], axis=-1)                    # (C_in, 2*tn)
        y = _mm_relu_bf16(w_ref, b_ref, h)                      # (C_out, 2*tn)
        t = y[:, :tn]                                           # un-fused template chain
        s = jnp.maximum(y[:, tn:], t)                           # fused source chain

    out_ref[0] = s.astype(out_ref.dtype)                        # (emb, tn)


# ---------------------------------- wrapper -----------------------------------

class PointNetFusionPallas:
    """Deterministic-parameter Pallas port of PointNetFusion (channel-major)."""

    def __init__(self, emb_dims=1024, input_shape='bnc', tn=512,
                 out_dtype=jnp.bfloat16, vmem_limit_bytes=48 << 20, seed=0):
        if input_shape not in ('bcn', 'bnc'):
            raise ValueError("Allowed shapes are 'bcn' and 'bnc'")
        if tn % 128 != 0:
            raise ValueError("tn must be a multiple of 128 (lane-dense tiles)")
        self.input_shape = input_shape
        self.emb_dims = emb_dims
        self.tn = tn
        self.out_dtype = out_dtype          # bf16 halves the dominant HBM write
        self.vmem_limit_bytes = vmem_limit_bytes
        self.channels = [3, 64, 64, 64, 128, emb_dims]

        key = jax.random.PRNGKey(seed)
        self.weights = []
        self.biases = []
        for li, (cin, cout) in enumerate(zip(self.channels[:-1], self.channels[1:])):
            key, kw, kb = jax.random.split(key, 3)
            bound = 1.0 / float(cin) ** 0.5          # nn.Conv1d default init range
            w = jax.random.uniform(kw, (cout, cin), jnp.float32, -bound, bound)
            b = jax.random.uniform(kb, (cout, 1), jnp.float32, -bound, bound)
            if li > 0:
                w = w.astype(jnp.bfloat16)           # MXU layers run in bf16
            self.weights.append(w)
            self.biases.append(b)

        self._template_points = None                 # cache points (cheap), not activations

    # ---- small helpers --------------------------------------------------------

    def _param_args(self):
        args = []
        for w, b in zip(self.weights, self.biases):
            args.extend([w, b])
        return args

    def _param_specs(self):
        specs = []
        for w, b in zip(self.weights, self.biases):
            specs.append(pl.BlockSpec(w.shape, lambda i, j: (0, 0)))
            specs.append(pl.BlockSpec(b.shape, lambda i, j: (0, 0)))
        return specs

    def _param_bytes(self):
        return sum(int(a.size) * a.dtype.itemsize for a in self._param_args())

    def _flops_per_point(self):
        return 2 * sum(cin * cout for cin, cout in
                       zip(self.channels[:-1], self.channels[1:]))

    def _pad_points(self, x_b3n):
        n = x_b3n.shape[2]
        n_pad = pl.cdiv(n, self.tn) * self.tn
        if n_pad != n:
            x_b3n = jnp.pad(x_b3n, ((0, 0), (0, 0), (0, n_pad - n)))
        return x_b3n, n_pad

    def _point_spec(self):
        return pl.BlockSpec((1, 3, self.tn), lambda b, j: (b, 0, j))

    def _out_spec(self):
        return pl.BlockSpec((1, self.emb_dims, self.tn), lambda b, j: (b, 0, j))

    def _compiler_params(self):
        return pltpu.CompilerParams(
            dimension_semantics=("parallel", "parallel"),
            vmem_limit_bytes=self.vmem_limit_bytes)

    # ---- pallas_call builders -------------------------------------------------

    def _run_template(self, x_pad, n_pad):
        b = x_pad.shape[0]
        grid = (b, n_pad // self.tn)
        flops = b * n_pad * self._flops_per_point()
        out_itemsize = jnp.dtype(self.out_dtype).itemsize
        bytes_acc = (int(x_pad.size) * x_pad.dtype.itemsize
                     + self._param_bytes()
                     + b * self.emb_dims * n_pad * out_itemsize)
        fn = pl.pallas_call(
            template_kernel,
            out_shape=jax.ShapeDtypeStruct((b, self.emb_dims, n_pad), self.out_dtype),
            grid_spec=pltpu.PrefetchScalarGridSpec(
                num_scalar_prefetch=0,
                grid=grid,
                in_specs=[self._point_spec()] + self._param_specs(),
                out_specs=self._out_spec(),
            ),
            compiler_params=self._compiler_params(),
            cost_estimate=pl.CostEstimate(flops=int(flops), transcendentals=0,
                                          bytes_accessed=int(bytes_acc)),
        )
        return fn(x_pad, *self._param_args())

    def _run_source(self, xt_pad, xs_pad, n_pad):
        b = xs_pad.shape[0]
        grid = (b, n_pad // self.tn)
        flops = 2 * b * n_pad * self._flops_per_point()   # template branch recomputed
        out_itemsize = jnp.dtype(self.out_dtype).itemsize
        bytes_acc = ((int(xt_pad.size) + int(xs_pad.size)) * xs_pad.dtype.itemsize
                     + self._param_bytes()
                     + b * self.emb_dims * n_pad * out_itemsize)
        fn = pl.pallas_call(
            fused_source_kernel,
            out_shape=jax.ShapeDtypeStruct((b, self.emb_dims, n_pad), self.out_dtype),
            grid_spec=pltpu.PrefetchScalarGridSpec(
                num_scalar_prefetch=0,
                grid=grid,
                in_specs=[self._point_spec(), self._point_spec()] + self._param_specs(),
                out_specs=self._out_spec(),
            ),
            compiler_params=self._compiler_params(),
            cost_estimate=pl.CostEstimate(flops=int(flops), transcendentals=0,
                                          bytes_accessed=int(bytes_acc)),
        )
        return fn(xt_pad, xs_pad, *self._param_args())

    # ---- public forward -------------------------------------------------------

    def __call__(self, input_data, tag):
        if self.input_shape == 'bnc':                      # (B, N, 3) -> (B, 3, N)
            x = jnp.transpose(input_data, (0, 2, 1))
        else:                                              # 'bcn': already (B, 3, N)
            x = input_data
        b, c, n = x.shape
        assert c == 3
        x = x.astype(jnp.float32)

        if tag == 'template':
            self._template_points = x                      # refresh cache on every call
            x_pad, n_pad = self._pad_points(x)
            out = self._run_template(x_pad, n_pad)
            return out[:, :, :n]                           # (B, emb_dims, N)
        elif tag == 'source':
            if self._template_points is None:
                raise RuntimeError("run tag='template' before tag='source'")
            xt = self._template_points
            if xt.shape != x.shape:
                raise ValueError("source and template point clouds must share (B, 3, N)")
            xt_pad, n_pad = self._pad_points(xt)
            xs_pad, _ = self._pad_points(x)
            out = self._run_source(xt_pad, xs_pad, n_pad)
            return out[:, :, :n]                           # (B, emb_dims, N)
        else:
            raise ValueError(f"unknown tag: {tag}")


# ------------------- pure-JAX reference (same precision path) -----------------

def _ref_preprocess(model, input_data):
    if model.input_shape == 'bnc':
        x = jnp.transpose(input_data, (0, 2, 1))
    else:
        x = input_data
    return x.astype(jnp.float32)                           # (B, 3, N)


def _ref_layer1(model, x_b3n):
    w1, b1 = model.weights[0], model.biases[0]             # (64,3) f32, (64,1) f32
    y = (w1[:, 0].reshape(1, -1, 1) * x_b3n[:, 0:1, :]
         + w1[:, 1].reshape(1, -1, 1) * x_b3n[:, 1:2, :]
         + w1[:, 2].reshape(1, -1, 1) * x_b3n[:, 2:3, :]
         + b1[None])
    return jnp.maximum(y, 0.0).astype(jnp.bfloat16)


def _ref_mm(w, b, h_bf16):
    y = jnp.einsum('oc,bcn->bon', w, h_bf16,
                   preferred_element_type=jnp.float32) + b[None]
    return jnp.maximum(y, 0.0).astype(jnp.bfloat16)


def _reference_template(model, input_data):
    x = _ref_preprocess(model, input_data)
    h = _ref_layer1(model, x)
    for w, b in zip(model.weights[1:], model.biases[1:]):
        h = _ref_mm(w, b, h)
    return h                                               # (B, emb, N) bf16


def _reference_source(model, src_input, tmpl_input):
    xt = _ref_preprocess(model, tmpl_input)
    xs = _ref_preprocess(model, src_input)
    t = _ref_layer1(model, xt)
    s = jnp.maximum(_ref_layer1(model, xs), t)
    for w, b in zip(model.weights[1:], model.biases[1:]):
        t_new = _ref_mm(w, b, t)
        s = jnp.maximum(_ref_mm(w, b, s), t_new)
        t = t_new
    return s                                               # (B, emb, N) bf16


if __name__ == "__main__":
    # N is deliberately not a multiple of the tile to exercise padding/remainder.
    B, N, EMB = 2, 200, 256
    key = jax.random.PRNGKey(0)
    k_t, k_s = jax.random.split(key)
    template_pts = jax.random.normal(k_t, (B, N, 3), jnp.float32)
    source_pts = jax.random.normal(k_s, (B, N, 3), jnp.float32)

    model = PointNetFusionPallas(emb_dims=EMB, input_shape='bnc', tn=128)

    out_template = model(template_pts, 'template')
    out_source = model(source_pts, 'source')
    jax.block_until_ready((out_template, out_source))

    assert out_template.shape == (B, EMB, N)
    assert out_source.shape == (B, EMB, N)

    ref_template = _reference_template(model, template_pts).astype(jnp.float32)
    ref_source = _reference_source(model, source_pts, template_pts).astype(jnp.float32)
    out_t32 = out_template.astype(jnp.float32)
    out_s32 = out_source.astype(jnp.float32)

    assert jnp.allclose(out_t32, ref_template, atol=3e-2, rtol=3e-2), \
        float(jnp.max(jnp.abs(out_t32 - ref_template)))
    assert jnp.allclose(out_s32, ref_source, atol=3e-2, rtol=3e-2), \
        float(jnp.max(jnp.abs(out_s32 - ref_source)))

    print("KERNEL_OK")
</pallas_src>

<mosaic_0001>
module attributes {stable_mosaic.version = 11 : i64} {
  func.func @template_kernel(%arg0: i32, %arg1: i32, %arg2: memref<1x3x128xf32, #tpu.memory_space<vmem>>, %arg3: memref<64x3xf32, #tpu.memory_space<vmem>>, %arg4: memref<64x1xf32, #tpu.memory_space<vmem>>, %arg5: memref<64x64xbf16, #tpu.memory_space<vmem>>, %arg6: memref<64x1xf32, #tpu.memory_space<vmem>>, %arg7: memref<64x64xbf16, #tpu.memory_space<vmem>>, %arg8: memref<64x1xf32, #tpu.memory_space<vmem>>, %arg9: memref<128x64xbf16, #tpu.memory_space<vmem>>, %arg10: memref<128x1xf32, #tpu.memory_space<vmem>>, %arg11: memref<256x128xbf16, #tpu.memory_space<vmem>>, %arg12: memref<256x1xf32, #tpu.memory_space<vmem>>, %arg13: memref<1x256x128xbf16, #tpu.memory_space<vmem>>) attributes {dimension_semantics = [#tpu.dimension_semantics<parallel>, #tpu.dimension_semantics<parallel>], iteration_bounds = array<i64: 2, 2>, scalar_prefetch = 0 : i64, scratch_operands = 0 : i64, tpu.core_type = #tpu.core_type<tc>, window_params = [{transform_indices = @transform_0, window_bounds = array<i64: 1, 3, 128>}, {pipeline_mode = #tpu.pipeline_mode<synchronous>, transform_indices = @transform_1, window_bounds = array<i64: 64, 3>}, {pipeline_mode = #tpu.pipeline_mode<synchronous>, transform_indices = @transform_2, window_bounds = array<i64: 64, 1>}, {pipeline_mode = #tpu.pipeline_mode<synchronous>, transform_indices = @transform_3, window_bounds = array<i64: 64, 64>}, {pipeline_mode = #tpu.pipeline_mode<synchronous>, transform_indices = @transform_4, window_bounds = array<i64: 64, 1>}, {pipeline_mode = #tpu.pipeline_mode<synchronous>, transform_indices = @transform_5, window_bounds = array<i64: 64, 64>}, {pipeline_mode = #tpu.pipeline_mode<synchronous>, transform_indices = @transform_6, window_bounds = array<i64: 64, 1>}, {pipeline_mode = #tpu.pipeline_mode<synchronous>, transform_indices = @transform_7, window_bounds = array<i64: 128, 64>}, {pipeline_mode = #tpu.pipeline_mode<synchronous>, transform_indices = @transform_8, window_bounds = array<i64: 128, 1>}, {pipeline_mode = #tpu.pipeline_mode<synchronous>, transform_indices = @transform_9, window_bounds = array<i64: 256, 128>}, {pipeline_mode = #tpu.pipeline_mode<synchronous>, transform_indices = @transform_10, window_bounds = array<i64: 256, 1>}, {transform_indices = @transform_11, window_bounds = array<i64: 1, 256, 128>}]} {
    %c0 = arith.constant 0 : index
    %c0_0 = arith.constant 0 : index
    %c0_1 = arith.constant 0 : index
    %0 = vector.load %arg2[%c0, %c0_0, %c0_1] : memref<1x3x128xf32, #tpu.memory_space<vmem>>, vector<1x3x128xf32>
    %1 = vector.shape_cast %0 : vector<1x3x128xf32> to vector<3x128xf32>
    %c0_2 = arith.constant 0 : index
    %c0_3 = arith.constant 0 : index
    %2 = vector.load %arg3[%c0_2, %c0_3] : memref<64x3xf32, #tpu.memory_space<vmem>>, vector<64x3xf32>
    %c0_4 = arith.constant 0 : index
    %c0_5 = arith.constant 0 : index
    %3 = vector.load %arg4[%c0_4, %c0_5] : memref<64x1xf32, #tpu.memory_space<vmem>>, vector<64x1xf32>
    %4 = vector.extract_strided_slice %2 {offsets = [0, 0], sizes = [64, 1], strides = [1, 1]} : vector<64x3xf32> to vector<64x1xf32>
    %5 = vector.extract_strided_slice %1 {offsets = [0, 0], sizes = [1, 128], strides = [1, 1]} : vector<3x128xf32> to vector<1x128xf32>
    %6 = vector.broadcast %4 : vector<64x1xf32> to vector<64x128xf32>
    %7 = vector.broadcast %5 : vector<1x128xf32> to vector<64x128xf32>
    %8 = arith.mulf %6, %7 : vector<64x128xf32>
    %9 = vector.extract_strided_slice %2 {offsets = [0, 1], sizes = [64, 1], strides = [1, 1]} : vector<64x3xf32> to vector<64x1xf32>
    %10 = vector.extract_strided_slice %1 {offsets = [1, 0], sizes = [1, 128], strides = [1, 1]} : vector<3x128xf32> to vector<1x128xf32>
    %11 = vector.broadcast %9 : vector<64x1xf32> to vector<64x128xf32>
    %12 = vector.broadcast %10 : vector<1x128xf32> to vector<64x128xf32>
    %13 = arith.mulf %11, %12 : vector<64x128xf32>
    %14 = arith.addf %8, %13 : vector<64x128xf32>
    %15 = vector.extract_strided_slice %2 {offsets = [0, 2], sizes = [64, 1], strides = [1, 1]} : vector<64x3xf32> to vector<64x1xf32>
    %16 = vector.extract_strided_slice %1 {offsets = [2, 0], sizes = [1, 128], strides = [1, 1]} : vector<3x128xf32> to vector<1x128xf32>
    %17 = vector.broadcast %15 : vector<64x1xf32> to vector<64x128xf32>
    %18 = vector.broadcast %16 : vector<1x128xf32> to vector<64x128xf32>
    %19 = arith.mulf %17, %18 : vector<64x128xf32>
    %20 = arith.addf %14, %19 : vector<64x128xf32>
    %21 = vector.broadcast %3 : vector<64x1xf32> to vector<64x128xf32>
    %22 = arith.addf %20, %21 : vector<64x128xf32>
    %cst = arith.constant 0.000000e+00 : f32
    %23 = vector.broadcast %cst : f32 to vector<64x128xf32>
    %24 = arith.maximumf %22, %23 : vector<64x128xf32>
    %25 = arith.truncf %24 : vector<64x128xf32> to vector<64x128xbf16>
    %c0_6 = arith.constant 0 : index
    %c0_7 = arith.constant 0 : index
    %26 = vector.load %arg5[%c0_6, %c0_7] : memref<64x64xbf16, #tpu.memory_space<vmem>>, vector<64x64xbf16>
    %cst_8 = arith.constant dense<0.000000e+00> : vector<64x128xf32>
    %27 = tpu.matmul %26, %25, %cst_8 {dimension_numbers = #tpu.dot_dimension_numbers<[1], [0], [0], [1], [0, 0, 1, 1], [], []>} : vector<64x64xbf16>, vector<64x128xbf16>, vector<64x128xf32> -> vector<64x128xf32>
    %c0_9 = arith.constant 0 : index
    %c0_10 = arith.constant 0 : index
    %28 = vector.load %arg6[%c0_9, %c0_10] : memref<64x1xf32, #tpu.memory_space<vmem>>, vector<64x1xf32>
    %29 = vector.broadcast %28 : vector<64x1xf32> to vector<64x128xf32>
    %30 = arith.addf %27, %29 : vector<64x128xf32>
    %cst_11 = arith.constant 0.000000e+00 : f32
    %31 = vector.broadcast %cst_11 : f32 to vector<64x128xf32>
    %32 = arith.maximumf %30, %31 : vector<64x128xf32>
    %33 = arith.truncf %32 : vector<64x128xf32> to vector<64x128xbf16>
    %c0_12 = arith.constant 0 : index
    %c0_13 = arith.constant 0 : index
    %34 = vector.load %arg7[%c0_12, %c0_13] : memref<64x64xbf16, #tpu.memory_space<vmem>>, vector<64x64xbf16>
    %cst_14 = arith.constant dense<0.000000e+00> : vector<64x128xf32>
    %35 = tpu.matmul %34, %33, %cst_14 {dimension_numbers = #tpu.dot_dimension_numbers<[1], [0], [0], [1], [0, 0, 1, 1], [], []>} : vector<64x64xbf16>, vector<64x128xbf16>, vector<64x128xf32> -> vector<64x128xf32>
    %c0_15 = arith.constant 0 : index
    %c0_16 = arith.constant 0 : index
    %36 = vector.load %arg8[%c0_15, %c0_16] : memref<64x1xf32, #tpu.memory_space<vmem>>, vector<64x1xf32>
    %37 = vector.broadcast %36 : vector<64x1xf32> to vector<64x128xf32>
    %38 = arith.addf %35, %37 : vector<64x128xf32>
    %cst_17 = arith.constant 0.000000e+00 : f32
    %39 = vector.broadcast %cst_17 : f32 to vector<64x128xf32>
    %40 = arith.maximumf %38, %39 : vector<64x128xf32>
    %41 = arith.truncf %40 : vector<64x128xf32> to vector<64x128xbf16>
    %c0_18 = arith.constant 0 : index
    %c0_19 = arith.constant 0 : index
    %42 = vector.load %arg9[%c0_18, %c0_19] : memref<128x64xbf16, #tpu.memory_space<vmem>>, vector<128x64xbf16>
    %cst_20 = arith.constant dense<0.000000e+00> : vector<128x128xf32>
    %43 = tpu.matmul %42, %41, %cst_20 {dimension_numbers = #tpu.dot_dimension_numbers<[1], [0], [0], [1], [0, 0, 1, 1], [], []>} : vector<128x64xbf16>, vector<64x128xbf16>, vector<128x128xf32> -> vector<128x128xf32>
    %c0_21 = arith.constant 0 : index
    %c0_22 = arith.constant 0 : index
    %44 = vector.load %arg10[%c0_21, %c0_22] : memref<128x1xf32, #tpu.memory_space<vmem>>, vector<128x1xf32>
    %45 = vector.broadcast %44 : vector<128x1xf32> to vector<128x128xf32>
    %46 = arith.addf %43, %45 : vector<128x128xf32>
    %cst_23 = arith.constant 0.000000e+00 : f32
    %47 = vector.broadcast %cst_23 : f32 to vector<128x128xf32>
    %48 = arith.maximumf %46, %47 : vector<128x128xf32>
    %49 = arith.truncf %48 : vector<128x128xf32> to vector<128x128xbf16>
    %c0_24 = arith.constant 0 : index
    %c0_25 = arith.constant 0 : index
    %50 = vector.load %arg11[%c0_24, %c0_25] : memref<256x128xbf16, #tpu.memory_space<vmem>>, vector<256x128xbf16>
    %cst_26 = arith.constant dense<0.000000e+00> : vector<256x128xf32>
    %51 = tpu.matmul %50, %49, %cst_26 {dimension_numbers = #tpu.dot_dimension_numbers<[1], [0], [0], [1], [0, 0, 1, 1], [], []>} : vector<256x128xbf16>, vector<128x128xbf16>, vector<256x128xf32> -> vector<256x128xf32>
    %c0_27 = arith.constant 0 : index
    %c0_28 = arith.constant 0 : index
    %52 = vector.load %arg12[%c0_27, %c0_28] : memref<256x1xf32, #tpu.memory_space<vmem>>, vector<256x1xf32>
    %53 = vector.broadcast %52 : vector<256x1xf32> to vector<256x128xf32>
    %54 = arith.addf %51, %53 : vector<256x128xf32>
    %cst_29 = arith.constant 0.000000e+00 : f32
    %55 = vector.broadcast %cst_29 : f32 to vector<256x128xf32>
    %56 = arith.maximumf %54, %55 : vector<256x128xf32>
    %57 = arith.truncf %56 : vector<256x128xf32> to vector<256x128xbf16>
    %c0_30 = arith.constant 0 : index
    %c0_31 = arith.constant 0 : index
    %c0_32 = arith.constant 0 : index
    %58 = vector.load %arg13[%c0_30, %c0_31, %c0_32] : memref<1x256x128xbf16, #tpu.memory_space<vmem>>, vector<1x256x128xbf16>
    %59 = vector.shape_cast %58 : vector<1x256x128xbf16> to vector<256x128xbf16>
    %60 = vector.shape_cast %57 : vector<256x128xbf16> to vector<1x256x128xbf16>
    tpu.vector_store %arg13[%c0_30, %c0_31, %c0_32], %60 {strides = array<i32>} : memref<1x256x128xbf16, #tpu.memory_space<vmem>>, vector<1x256x128xbf16>,
    return
  }
  func.func @transform_0(%arg0: i32, %arg1: i32) -> (i32, i32, i32) {
    %c0_i32 = arith.constant 0 : i32
    %c0_i32_0 = arith.constant 0 : i32
    return %arg0, %c0_i32, %arg1 : i32, i32, i32
  }
  func.func @transform_1(%arg0: i32, %arg1: i32) -> (i32, i32) {
    %c0_i32 = arith.constant 0 : i32
    %c0_i32_0 = arith.constant 0 : i32
    %c0_i32_1 = arith.constant 0 : i32
    return %c0_i32, %c0_i32_0 : i32, i32
  }
  func.func @transform_2(%arg0: i32, %arg1: i32) -> (i32, i32) {
    %c0_i32 = arith.constant 0 : i32
    %c0_i32_0 = arith.constant 0 : i32
    %c0_i32_1 = arith.constant 0 : i32
    return %c0_i32, %c0_i32_0 : i32, i32
  }
  func.func @transform_3(%arg0: i32, %arg1: i32) -> (i32, i32) {
    %c0_i32 = arith.constant 0 : i32
    %c0_i32_0 = arith.constant 0 : i32
    %c0_i32_1 = arith.constant 0 : i32
    return %c0_i32, %c0_i32_0 : i32, i32
  }
  func.func @transform_4(%arg0: i32, %arg1: i32) -> (i32, i32) {
    %c0_i32 = arith.constant 0 : i32
    %c0_i32_0 = arith.constant 0 : i32
    %c0_i32_1 = arith.constant 0 : i32
    return %c0_i32, %c0_i32_0 : i32, i32
  }
  func.func @transform_5(%arg0: i32, %arg1: i32) -> (i32, i32) {
    %c0_i32 = arith.constant 0 : i32
    %c0_i32_0 = arith.constant 0 : i32
    %c0_i32_1 = arith.constant 0 : i32
    return %c0_i32, %c0_i32_0 : i32, i32
  }
  func.func @transform_6(%arg0: i32, %arg1: i32) -> (i32, i32) {
    %c0_i32 = arith.constant 0 : i32
    %c0_i32_0 = arith.constant 0 : i32
    %c0_i32_1 = arith.constant 0 : i32
    return %c0_i32, %c0_i32_0 : i32, i32
  }
  func.func @transform_7(%arg0: i32, %arg1: i32) -> (i32, i32) {
    %c0_i32 = arith.constant 0 : i32
    %c0_i32_0 = arith.constant 0 : i32
    %c0_i32_1 = arith.constant 0 : i32
    return %c0_i32, %c0_i32_0 : i32, i32
  }
  func.func @transform_8(%arg0: i32, %arg1: i32) -> (i32, i32) {
    %c0_i32 = arith.constant 0 : i32
    %c0_i32_0 = arith.constant 0 : i32
    %c0_i32_1 = arith.constant 0 : i32
    return %c0_i32, %c0_i32_0 : i32, i32
  }
  func.func @transform_9(%arg0: i32, %arg1: i32) -> (i32, i32) {
    %c0_i32 = arith.constant 0 : i32
    %c0_i32_0 = arith.constant 0 : i32
    %c0_i32_1 = arith.constant 0 : i32
    return %c0_i32, %c0_i32_0 : i32, i32
  }
  func.func @transform_10(%arg0: i32, %arg1: i32) -> (i32, i32) {
    %c0_i32 = arith.constant 0 : i32
    %c0_i32_0 = arith.constant 0 : i32
    %c0_i32_1 = arith.constant 0 : i32
    return %c0_i32, %c0_i32_0 : i32, i32
  }
  func.func @transform_11(%arg0: i32, %arg1: i32) -> (i32, i32, i32) {
    %c0_i32 = arith.constant 0 : i32
    %c0_i32_0 = arith.constant 0 : i32
    return %arg0, %c0_i32, %arg1 : i32, i32, i32
  }
}

</mosaic_0001>

<llo_original>
// kernel: tpu_custom_call.1
$region0: #{tpu_custom_call.1}
  #allocation0 [shape = 'u32[]', space=smem, size = 0x4, offset = 0x4, fixed_abs, tag = 'smem constant byte address 0x4 - core index']
  #allocation1 [shape = 'u32[144,128]{1,0:T(1,128)}', space=vmem, size = 0x12000, scoped, tag = 'internal scratch']
  %s0 = inlined_call_operand.vmem [shape: f32[2,3,256], index: 0, kind: input, shape index: {}]
  %s1 = inlined_call_operand.vmem [shape: f32[64,3], index: 1, kind: input, shape index: {}]
  %s2 = inlined_call_operand.vmem [shape: f32[64,1], index: 2, kind: input, shape index: {}]
  %s3 = inlined_call_operand.vmem [shape: bf16[64,64], index: 3, kind: input, shape index: {}]
  %s4 = inlined_call_operand.vmem [shape: f32[64,1], index: 4, kind: input, shape index: {}]
  %s5 = inlined_call_operand.vmem [shape: bf16[64,64], index: 5, kind: input, shape index: {}]
  %s6 = inlined_call_operand.vmem [shape: f32[64,1], index: 6, kind: input, shape index: {}]
  %s7 = inlined_call_operand.vmem [shape: bf16[128,64], index: 7, kind: input, shape index: {}]
  %s8 = inlined_call_operand.vmem [shape: f32[128,1], index: 8, kind: input, shape index: {}]
  %s9 = inlined_call_operand.vmem [shape: bf16[256,128], index: 9, kind: input, shape index: {}]
  %s10 = inlined_call_operand.vmem [shape: f32[256,1], index: 10, kind: input, shape index: {}]
  %s11 = inlined_call_operand.hbm [shape: bf16[2,256,256], index: 11, kind: output, shape index: {}]
  %s12 = sld [smem:[#allocation0]]
  $region77: #{tpu_custom_call.1} parent=0
    _
  %s14 = ssub.s32 1, %s12
  %s15 = scalar_select 0, %s14, %s12
  $region1: #{tpu_custom_call.1} parent=0
    #allocation2 [shape = 'u8[131072]{0}', space=vmem, size = 0x20000, scoped, tag = 'output window, operand 0']
    #allocation3 [shape = 's32[2]{0}', space=sflag, size = 0x8, scoped, tag = 'scoped memory for tpu_custom_call.1']
    %16 = vsyncpa [#allocation3], 0
    %s17 = scalar_lea.sflag [#allocation3], 1
    %18 = vsyncpa %s17, 0
    loop: start=0, step=1, limit=6
    $region2: #{tpu_custom_call.1} parent=1 // loop_pre_header
      _
    $region3: #{tpu_custom_call.1} parent=1 // loop_header
      %s20 = sphi 0, %s24
      %p21 = scmp.ge.s32.totalorder %s20, 6
      %s27 = sphi 0, %s39
      %s28 = sphi 0, %s35
      %s29 = sphi 0, %s27
      %s30 = sphi 0, %s28
      %s31 = sphi 0, %s29
      %s32 = sphi 0, %s30
      %s44 = sphi 0, %s46
      %s47 = sphi 0, %s44
      %s48 = sphi 0, %s47
      %s64 = sphi 0, %s48
      %s68 = sphi 0, %s68
      %s70 = sphi 0, %s68
      %s71 = sphi 0, %s70
      %s85 = sphi 0, %s71
      %s89 = sphi 0, %s89
      %s91 = sphi 0, %s89
      %s92 = sphi 0, %s91
      %s106 = sphi 0, %s92
      %s110 = sphi 0, %s110
      %s112 = sphi 0, %s110
      %s113 = sphi 0, %s112
      %s127 = sphi 0, %s113
      %s131 = sphi 0, %s131
      %s133 = sphi 0, %s131
      %s134 = sphi 0, %s133
      %s148 = sphi 0, %s134
      %s152 = sphi 0, %s152
      %s154 = sphi 0, %s152
      %s155 = sphi 0, %s154
      %s169 = sphi 0, %s155
      %s173 = sphi 0, %s173
      %s175 = sphi 0, %s173
      %s176 = sphi 0, %s175
      %s190 = sphi 0, %s176
      %s194 = sphi 0, %s194
      %s196 = sphi 0, %s194
      %s197 = sphi 0, %s196
      %s211 = sphi 0, %s197
      %s215 = sphi 0, %s215
      %s217 = sphi 0, %s215
      %s218 = sphi 0, %s217
      %s232 = sphi 0, %s218
      %s236 = sphi 0, %s236
      %s238 = sphi 0, %s236
      %s239 = sphi 0, %s238
      %s253 = sphi 0, %s239
      %s257 = sphi 0, %s257
      %s259 = sphi 0, %s257
      %s260 = sphi 0, %s259
      %s274 = sphi 0, %s260
      %s282 = sphi 0, %s284
      %s285 = sphi 0, %s282
      %s286 = sphi 0, %s285
      %s302 = sphi 0, %s286
    $region4: #{tpu_custom_call.1} parent=1 // loop_header_branch
      %23 = sbr.rel (%p21) target = $region8
    $region5: #{tpu_custom_call.1} parent=1 // loop_body
      %s25 = ssub.s32 %s20, 1
      %s26 = ssub.s32 %s20, 2
      %s33 = sadd.s32 1, %s28
      %p34 = scmp.ge.s32.totalorder %s33, 2
      %s35 = scalar_select %p34, 0, %s33
      %s36 = sadd.s32 1, %s27
      %s37 = scalar_select %p34, %s36, %s27
      %p38 = scmp.ge.s32.totalorder %s37, 2
      %s39 = scalar_select %p38, 0, %s37
      %s40 = ssub.s32 %s27, %s39
      %s41 = ssub.s32 %s28, %s35
      %s42 = sor.u32 %s40, %s41
      %p43 = scmp.eq.s32.totalorder %s42, 0
      %s45 = sadd.s32 %s44, 1
      %s46 = scalar_select %p43, %s44, %s45
      %p49 = pneg %p43
      %p50 = scmp.eq.s32.totalorder %s20, 3
      %p51 = por %p49, %p50
      %p52 = scmp.ne.s32.totalorder %s44, %s47
      %p53 = scmp.eq.s32.totalorder %s20, 0
      %p54 = por %p52, %p53
      %p55 = scmp.ne.s32.totalorder %s44, %s47
      %p56 = scmp.eq.s32.totalorder %s25, 3
      %p57 = por %p55, %p56
      %p58 = scmp.ne.s32.totalorder %s47, %s48
      %p59 = scmp.eq.s32.totalorder %s25, 0
      %p60 = por %p58, %p59
      %p61 = scmp.ne.s32.totalorder %s47, %s48
      %p62 = scmp.eq.s32.totalorder %s26, 3
      %p63 = por %p61, %p62
      %p65 = scmp.ne.s32.totalorder %s48, %s64
      %p66 = scmp.eq.s32.totalorder %s26, 0
      %p67 = por %p65, %p66
      %s69 = sadd.s32 %s68, 1
      %p72 = scmp.eq.s32.totalorder %s20, 3
      %p73 = scmp.ne.s32.totalorder %s68, %s70
      %p74 = scmp.eq.s32.totalorder %s20, 0
      %p75 = por %p73, %p74
      %p76 = scmp.ne.s32.totalorder %s68, %s70
      %p77 = scmp.eq.s32.totalorder %s25, 3
      %p78 = por %p76, %p77
      %p79 = scmp.ne.s32.totalorder %s70, %s71
      %p80 = scmp.eq.s32.totalorder %s25, 0
      %p81 = por %p79, %p80
      %p82 = scmp.ne.s32.totalorder %s70, %s71
      %p83 = scmp.eq.s32.totalorder %s26, 3
      %p84 = por %p82, %p83
      %p86 = scmp.ne.s32.totalorder %s71, %s85
      %p87 = scmp.eq.s32.totalorder %s26, 0
      %p88 = por %p86, %p87
      %s90 = sadd.s32 %s89, 1
      %p93 = scmp.eq.s32.totalorder %s20, 3
      %p94 = scmp.ne.s32.totalorder %s89, %s91
      %p95 = scmp.eq.s32.totalorder %s20, 0
      %p96 = por %p94, %p95
      %p97 = scmp.ne.s32.totalorder %s89, %s91
      %p98 = scmp.eq.s32.totalorder %s25, 3
      %p99 = por %p97, %p98
      %p100 = scmp.ne.s32.totalorder %s91, %s92
      %p101 = scmp.eq.s32.totalorder %s25, 0
      %p102 = por %p100, %p101
      %p103 = scmp.ne.s32.totalorder %s91, %s92
      %p104 = scmp.eq.s32.totalorder %s26, 3
      %p105 = por %p103, %p104
      %p107 = scmp.ne.s32.totalorder %s92, %s106
      %p108 = scmp.eq.s32.totalorder %s26, 0
      %p109 = por %p107, %p108
      %s111 = sadd.s32 %s110, 1
      %p114 = scmp.eq.s32.totalorder %s20, 3
      %p115 = scmp.ne.s32.totalorder %s110, %s112
      %p116 = scmp.eq.s32.totalorder %s20, 0
      %p117 = por %p115, %p116
      %p118 = scmp.ne.s32.totalorder %s110, %s112
      %p119 = scmp.eq.s32.totalorder %s25, 3
      %p120 = por %p118, %p119
      %p121 = scmp.ne.s32.totalorder %s112, %s113
      %p122 = scmp.eq.s32.totalorder %s25, 0
      %p123 = por %p121, %p122
      %p124 = scmp.ne.s32.totalorder %s112, %s113
      %p125 = scmp.eq.s32.totalorder %s26, 3
      %p126 = por %p124, %p125
      %p128 = scmp.ne.s32.totalorder %s113, %s127
      %p129 = scmp.eq.s32.totalorder %s26, 0
      %p130 = por %p128, %p129
      %s132 = sadd.s32 %s131, 1
      %p135 = scmp.eq.s32.totalorder %s20, 3
      %p136 = scmp.ne.s32.totalorder %s131, %s133
      %p137 = scmp.eq.s32.totalorder %s20, 0
      %p138 = por %p136, %p137
      %p139 = scmp.ne.s32.totalorder %s131, %s133
      %p140 = scmp.eq.s32.totalorder %s25, 3
      %p141 = por %p139, %p140
      %p142 = scmp.ne.s32.totalorder %s133, %s134
      %p143 = scmp.eq.s32.totalorder %s25, 0
      %p144 = por %p142, %p143
      %p145 = scmp.ne.s32.totalorder %s133, %s134
      %p146 = scmp.eq.s32.totalorder %s26, 3
      %p147 = por %p145, %p146
      %p149 = scmp.ne.s32.totalorder %s134, %s148
      %p150 = scmp.eq.s32.totalorder %s26, 0
      %p151 = por %p149, %p150
      %s153 = sadd.s32 %s152, 1
      %p156 = scmp.eq.s32.totalorder %s20, 3
      %p157 = scmp.ne.s32.totalorder %s152, %s154
      %p158 = scmp.eq.s32.totalorder %s20, 0
      %p159 = por %p157, %p158
      %p160 = scmp.ne.s32.totalorder %s152, %s154
      %p161 = scmp.eq.s32.totalorder %s25, 3
      %p162 = por %p160, %p161
      %p163 = scmp.ne.s32.totalorder %s154, %s155
      %p164 = scmp.eq.s32.totalorder %s25, 0
      %p165 = por %p163, %p164
      %p166 = scmp.ne.s32.totalorder %s154, %s155
      %p167 = scmp.eq.s32.totalorder %s26, 3
      %p168 = por %p166, %p167
      %p170 = scmp.ne.s32.totalorder %s155, %s169
      %p171 = scmp.eq.s32.totalorder %s26, 0
      %p172 = por %p170, %p171
      %s174 = sadd.s32 %s173, 1
      %p177 = scmp.eq.s32.totalorder %s20, 3
      %p178 = scmp.ne.s32.totalorder %s173, %s175
      %p179 = scmp.eq.s32.totalorder %s20, 0
      %p180 = por %p178, %p179
      %p181 = scmp.ne.s32.totalorder %s173, %s175
      %p182 = scmp.eq.s32.totalorder %s25, 3
      %p183 = por %p181, %p182
      %p184 = scmp.ne.s32.totalorder %s175, %s176
      %p185 = scmp.eq.s32.totalorder %s25, 0
      %p186 = por %p184, %p185
      %p187 = scmp.ne.s32.totalorder %s175, %s176
      %p188 = scmp.eq.s32.totalorder %s26, 3
      %p189 = por %p187, %p188
      %p191 = scmp.ne.s32.totalorder %s176, %s190
      %p192 = scmp.eq.s32.totalorder %s26, 0
      %p193 = por %p191, %p192
      %s195 = sadd.s32 %s194, 1
      %p198 = scmp.eq.s32.totalorder %s20, 3
      %p199 = scmp.ne.s32.totalorder %s194, %s196
      %p200 = scmp.eq.s32.totalorder %s20, 0
      %p201 = por %p199, %p200
      %p202 = scmp.ne.s32.totalorder %s194, %s196
      %p203 = scmp.eq.s32.totalorder %s25, 3
      %p204 = por %p202, %p203
      %p205 = scmp.ne.s32.totalorder %s196, %s197
      %p206 = scmp.eq.s32.totalorder %s25, 0
      %p207 = por %p205, %p206
      %p208 = scmp.ne.s32.totalorder %s196, %s197
      %p209 = scmp.eq.s32.totalorder %s26, 3
      %p210 = por %p208, %p209
      %p212 = scmp.ne.s32.totalorder %s197, %s211
      %p213 = scmp.eq.s32.totalorder %s26, 0
      %p214 = por %p212, %p213
      %s216 = sadd.s32 %s215, 1
      %p219 = scmp.eq.s32.totalorder %s20, 3
      %p220 = scmp.ne.s32.totalorder %s215, %s217
      %p221 = scmp.eq.s32.totalorder %s20, 0
      %p222 = por %p220, %p221
      %p223 = scmp.ne.s32.totalorder %s215, %s217
      %p224 = scmp.eq.s32.totalorder %s25, 3
      %p225 = por %p223, %p224
      %p226 = scmp.ne.s32.totalorder %s217, %s218
      %p227 = scmp.eq.s32.totalorder %s25, 0
      %p228 = por %p226, %p227
      %p229 = scmp.ne.s32.totalorder %s217, %s218
      %p230 = scmp.eq.s32.totalorder %s26, 3
      %p231 = por %p229, %p230
      %p233 = scmp.ne.s32.totalorder %s218, %s232
      %p234 = scmp.eq.s32.totalorder %s26, 0
      %p235 = por %p233, %p234
      %s237 = sadd.s32 %s236, 1
      %p240 = scmp.eq.s32.totalorder %s20, 3
      %p241 = scmp.ne.s32.totalorder %s236, %s238
      %p242 = scmp.eq.s32.totalorder %s20, 0
      %p243 = por %p241, %p242
      %p244 = scmp.ne.s32.totalorder %s236, %s238
      %p245 = scmp.eq.s32.totalorder %s25, 3
      %p246 = por %p244, %p245
      %p247 = scmp.ne.s32.totalorder %s238, %s239
      %p248 = scmp.eq.s32.totalorder %s25, 0
      %p249 = por %p247, %p248
      %p250 = scmp.ne.s32.totalorder %s238, %s239
      %p251 = scmp.eq.s32.totalorder %s26, 3
      %p252 = por %p250, %p251
      %p254 = scmp.ne.s32.totalorder %s239, %s253
      %p255 = scmp.eq.s32.totalorder %s26, 0
      %p256 = por %p254, %p255
      %s258 = sadd.s32 %s257, 1
      %p261 = scmp.eq.s32.totalorder %s20, 3
      %p262 = scmp.ne.s32.totalorder %s257, %s259
      %p263 = scmp.eq.s32.totalorder %s20, 0
      %p264 = por %p262, %p263
      %p265 = scmp.ne.s32.totalorder %s257, %s259
      %p266 = scmp.eq.s32.totalorder %s25, 3
      %p267 = por %p265, %p266
      %p268 = scmp.ne.s32.totalorder %s259, %s260
      %p269 = scmp.eq.s32.totalorder %s25, 0
      %p270 = por %p268, %p269
      %p271 = scmp.ne.s32.totalorder %s259, %s260
      %p272 = scmp.eq.s32.totalorder %s26, 3
      %p273 = por %p271, %p272
      %p275 = scmp.ne.s32.totalorder %s260, %s274
      %p276 = scmp.eq.s32.totalorder %s26, 0
      %p277 = por %p275, %p276
      %s278 = ssub.s32 %s27, %s39
      %s279 = ssub.s32 %s28, %s35
      %s280 = sor.u32 %s278, %s279
      %p281 = scmp.eq.s32.totalorder %s280, 0
      %s283 = sadd.s32 %s282, 1
      %s284 = scalar_select %p281, %s282, %s283
      %p287 = pneg %p281
      %p288 = scmp.eq.s32.totalorder %s20, 3
      %p289 = por %p287, %p288
      %p290 = scmp.ne.s32.totalorder %s282, %s285
      %p291 = scmp.eq.s32.totalorder %s20, 0
      %p292 = por %p290, %p291
      %p293 = scmp.ne.s32.totalorder %s282, %s285
      %p294 = scmp.eq.s32.totalorder %s25, 3
      %p295 = por %p293, %p294
      %p296 = scmp.ne.s32.totalorder %s285, %s286
      %p297 = scmp.eq.s32.totalorder %s25, 0
      %p298 = por %p296, %p297
      %p299 = scmp.ne.s32.totalorder %s285, %s286
      %p300 = scmp.eq.s32.totalorder %s26, 3
      %p301 = por %p299, %p300
      %p303 = scmp.ne.s32.totalorder %s286, %s302
      %p304 = scmp.eq.s32.totalorder %s26, 0
      %p305 = por %p303, %p304
      %p306 = scmp.le.s32.totalorder 1, %s20
      %p307 = scmp.lt.s32.totalorder %s20, 5
      %p308 = pnand %p306, %p307
      %p309 = pneg %p308
      // Predicated region
      $region9: #{tpu_custom_call.1} parent=5 // pred_check
        _
      $region10: #{tpu_custom_call.1} parent=5 // pred_check_branch
        %311 = sbr.rel (%p308) target = $region12
      $region11: #{tpu_custom_call.1} parent=5 // pred_region
        %s312 = ssub.s32 %s20, 1
        // Predicated region
        $region13: #{tpu_custom_call.1} parent=11 // pred_check
          %p313 = pneg %p81
        $region14: #{tpu_custom_call.1} parent=11 // pred_check_branch
          %315 = sbr.rel (%p313) target = $region16
        $region15: #{tpu_custom_call.1} parent=11 // pred_region
          _
        $region16: #{tpu_custom_call.1} parent=11 // pred_fallthru
          _
        // Predicated region
        $region17: #{tpu_custom_call.1} parent=11 // pred_check
          %p316 = pneg %p102
        $region18: #{tpu_custom_call.1} parent=11 // pred_check_branch
          %318 = sbr.rel (%p316) target = $region20
        $region19: #{tpu_custom_call.1} parent=11 // pred_region
          _
        $region20: #{tpu_custom_call.1} parent=11 // pred_fallthru
          _
        // Predicated region
        $region21: #{tpu_custom_call.1} parent=11 // pred_check
          %p319 = pneg %p123
        $region22: #{tpu_custom_call.1} parent=11 // pred_check_branch
          %321 = sbr.rel (%p319) target = $region24
        $region23: #{tpu_custom_call.1} parent=11 // pred_region
          _
        $region24: #{tpu_custom_call.1} parent=11 // pred_fallthru
          _
        // Predicated region
        $region25: #{tpu_custom_call.1} parent=11 // pred_check
          %p322 = pneg %p144
        $region26: #{tpu_custom_call.1} parent=11 // pred_check_branch
          %324 = sbr.rel (%p322) target = $region28
        $region27: #{tpu_custom_call.1} parent=11 // pred_region
          _
        $region28: #{tpu_custom_call.1} parent=11 // pred_fallthru
          _
        // Predicated region
        $region29: #{tpu_custom_call.1} parent=11 // pred_check
          %p325 = pneg %p165
        $region30: #{tpu_custom_call.1} parent=11 // pred_check_branch
          %327 = sbr.rel (%p325) target = $region32
        $region31: #{tpu_custom_call.1} parent=11 // pred_region
          _
        $region32: #{tpu_custom_call.1} parent=11 // pred_fallthru
          _
        // Predicated region
        $region33: #{tpu_custom_call.1} parent=11 // pred_check
          %p328 = pneg %p186
        $region34: #{tpu_custom_call.1} parent=11 // pred_check_branch
          %330 = sbr.rel (%p328) target = $region36
        $region35: #{tpu_custom_call.1} parent=11 // pred_region
          _
        $region36: #{tpu_custom_call.1} parent=11 // pred_fallthru
          _
        // Predicated region
        $region37: #{tpu_custom_call.1} parent=11 // pred_check
          %p331 = pneg %p207
        $region38: #{tpu_custom_call.1} parent=11 // pred_check_branch
          %333 = sbr.rel (%p331) target = $region40
        $region39: #{tpu_custom_call.1} parent=11 // pred_region
          _
        $region40: #{tpu_custom_call.1} parent=11 // pred_fallthru
          _
        // Predicated region
        $region41: #{tpu_custom_call.1} parent=11 // pred_check
          %p334 = pneg %p228
        $region42: #{tpu_custom_call.1} parent=11 // pred_check_branch
          %336 = sbr.rel (%p334) target = $region44
        $region43: #{tpu_custom_call.1} parent=11 // pred_region
          _
        $region44: #{tpu_custom_call.1} parent=11 // pred_fallthru
          _
        // Predicated region
        $region45: #{tpu_custom_call.1} parent=11 // pred_check
          %p337 = pneg %p249
        $region46: #{tpu_custom_call.1} parent=11 // pred_check_branch
          %339 = sbr.rel (%p337) target = $region48
        $region47: #{tpu_custom_call.1} parent=11 // pred_region
          _
        $region48: #{tpu_custom_call.1} parent=11 // pred_fallthru
          _
        // Predicated region
        $region49: #{tpu_custom_call.1} parent=11 // pred_check
          %p340 = pneg %p270
        $region50: #{tpu_custom_call.1} parent=11 // pred_check_branch
          %342 = sbr.rel (%p340) target = $region52
        $region51: #{tpu_custom_call.1} parent=11 // pred_region
          _
        $region52: #{tpu_custom_call.1} parent=11 // pred_fallthru
          _
      $region12: #{tpu_custom_call.1} parent=5 // pred_fallthru
        _
      %p343 = scmp.lt.s32.totalorder %s20, 4
      // Predicated region
      $region53: #{tpu_custom_call.1} parent=5 // pred_check
        %p344 = pneg %p343
      $region54: #{tpu_custom_call.1} parent=5 // pred_check_branch
        %346 = sbr.rel (%p344) target = $region56
      $region55: #{tpu_custom_call.1} parent=5 // pred_region
        // Predicated region
        $region57: #{tpu_custom_call.1} parent=55 // pred_check
          %p347 = pneg %p54
        $region58: #{tpu_custom_call.1} parent=55 // pred_check_branch
          %349 = sbr.rel (%p347) target = $region60
        $region59: #{tpu_custom_call.1} parent=55 // pred_region
          %p350 = scmp.lt.s32.totalorder %s27, 1
          %s351 = scalar_select %p350, %s27, 1
          %p352 = scmp.lt.s32.totalorder %s28, 1
          %s353 = scalar_select %p352, %s28, 1
          %s354 = smul.addr %s351, 2
          %s355 = sadd.s32 %s353, %s354
          %s356 = smul.addr %s355, 4
          %s357 = scalar_lea.vmem %s0, %s356
        $region60: #{tpu_custom_call.1} parent=55 // pred_fallthru
          _
      $region56: #{tpu_custom_call.1} parent=5 // pred_fallthru
        _
      %p358 = scmp.le.s32.totalorder 1, %s20
      %p359 = scmp.lt.s32.totalorder %s20, 5
      %p360 = pnand %p358, %p359
      %p361 = pneg %p360
      // Predicated region
      $region61: #{tpu_custom_call.1} parent=5 // pred_check
        _
      $region62: #{tpu_custom_call.1} parent=5 // pred_check_branch
        %363 = sbr.rel (%p360) target = $region64
      $region63: #{tpu_custom_call.1} parent=5 // pred_region
        %s364 = ssub.s32 %s20, 1
        %p365 = scmp.lt.s32.totalorder %s29, 1
        %s366 = scalar_select %p365, %s29, 1
        %p367 = scmp.lt.s32.totalorder %s30, 1
        %s368 = scalar_select %p367, %s30, 1
        %s369 = smul.addr %s366, 2
        %s370 = sadd.s32 %s368, %s369
        %s371 = smul.addr %s370, 4
        %s372 = scalar_lea.vmem %s0, %s371
        %p373 = pneg %p60
        %p374 = pneg %p57
        %p375 = pneg %p81
        %p376 = pneg %p78
        %p377 = pneg %p102
        %p378 = pneg %p99
        %p379 = pneg %p123
        %p380 = pneg %p120
        %p381 = pneg %p144
        %p382 = pneg %p141
        %p383 = pneg %p165
        %p384 = pneg %p162
        %p385 = pneg %p186
        %p386 = pneg %p183
        %p387 = pneg %p207
        %p388 = pneg %p204
        %p389 = pneg %p228
        %p390 = pneg %p225
        %p391 = pneg %p249
        %p392 = pneg %p246
        %p393 = pneg %p270
        %p394 = pneg %p267
        %p395 = pneg %p298
        %p396 = pneg %p295
        %s397 = sand.u32 %s285, 1
        %s398 = scalar_lea.sflag [#allocation3], %s397
        %s399 = sand.u32 %s285, 1
        %s400 = smul.addr %s399, 128
        %s401 = scalar_lea.vmem [#allocation2], %s400
        %p402 = scmp.lt.s32.totalorder %s29, 1
        %s403 = scalar_select %p402, %s29, 1
        %p404 = scmp.lt.s32.totalorder %s30, 1
        %s405 = scalar_select %p404, %s30, 1
        %s406 = smul.addr %s403, 2
        %s407 = sadd.s32 %s405, %s406
        %s408 = smul.addr %s407, 4
        %s409 = scalar_lea.vmem %s0, %s408
        %v411 = vld [vmem:[%s409] sm:$0x7]
        %v412 = vld [vmem:[%s1] sm:$0xff]
        %v413 = vld [vmem:[%s1 + $0x8] sm:$0xff]
        %v414 = vld [vmem:[%s1 + $0x10] sm:$0xff]
        %v415 = vld [vmem:[%s1 + $0x18] sm:$0xff]
        %v416 = vld [vmem:[%s1 + $0x20] sm:$0xff]
        %v417 = vld [vmem:[%s1 + $0x28] sm:$0xff]
        %v418 = vld [vmem:[%s1 + $0x30] sm:$0xff]
        %v419 = vld [vmem:[%s1 + $0x38] sm:$0xff]
        %v420 = vld [vmem:[%s2] sm:$0xff]
        %v421 = vld [vmem:[%s2 + $0x8] sm:$0xff]
        %v422 = vld [vmem:[%s2 + $0x10] sm:$0xff]
        %v423 = vld [vmem:[%s2 + $0x18] sm:$0xff]
        %v424 = vld [vmem:[%s2 + $0x20] sm:$0xff]
        %v425 = vld [vmem:[%s2 + $0x28] sm:$0xff]
        %v426 = vld [vmem:[%s2 + $0x30] sm:$0xff]
        %v427 = vld [vmem:[%s2 + $0x38] sm:$0xff]
        %429 = vset.pattern.permute.xlu0 0
        %430 = vperm.xlu0 %429, %v412
        %v431 = vpop.permute.xlu0 %430
        %434 = vset.pattern.permute.xlu0 0
        %435 = vperm.xlu0 %434, %v413
        %v436 = vpop.permute.xlu0 %435
        %439 = vset.pattern.permute.xlu0 0
        %440 = vperm.xlu0 %439, %v414
        %v441 = vpop.permute.xlu0 %440
        %444 = vset.pattern.permute.xlu0 0
        %445 = vperm.xlu0 %444, %v415
        %v446 = vpop.permute.xlu0 %445
        %449 = vset.pattern.permute.xlu0 0
        %450 = vperm.xlu0 %449, %v416
        %v451 = vpop.permute.xlu0 %450
        %454 = vset.pattern.permute.xlu0 0
        %455 = vperm.xlu0 %454, %v417
        %v456 = vpop.permute.xlu0 %455
        %459 = vset.pattern.permute.xlu0 0
        %460 = vperm.xlu0 %459, %v418
        %v461 = vpop.permute.xlu0 %460
        %464 = vset.pattern.permute.xlu0 0
        %465 = vperm.xlu0 %464, %v419
        %v466 = vpop.permute.xlu0 %465
        %v468 = vlaneseq
        %v469 = vshrl.u32 %v468, 7
        %v470 = vsub.s32 0, %v469
        %v471 = vrot.slane %v411, %v470
        %v472 = vmul.f32 %v431, %v471
        %v473 = vmul.f32 %v436, %v471
        %v474 = vmul.f32 %v441, %v471
        %v475 = vmul.f32 %v446, %v471
        %v476 = vmul.f32 %v451, %v471
        %v477 = vmul.f32 %v456, %v471
        %v478 = vmul.f32 %v461, %v471
        %v479 = vmul.f32 %v466, %v471
        %480 = vset.pattern.permute.xlu0 1
        %481 = vperm.xlu0 %480, %v412
        %v482 = vpop.permute.xlu0 %481
        %484 = vset.pattern.permute.xlu0 1
        %485 = vperm.xlu0 %484, %v413
        %v486 = vpop.permute.xlu0 %485
        %488 = vset.pattern.permute.xlu0 1
        %489 = vperm.xlu0 %488, %v414
        %v490 = vpop.permute.xlu0 %489
        %492 = vset.pattern.permute.xlu0 1
        %493 = vperm.xlu0 %492, %v415
        %v494 = vpop.permute.xlu0 %493
        %496 = vset.pattern.permute.xlu0 1
        %497 = vperm.xlu0 %496, %v416
        %v498 = vpop.permute.xlu0 %497
        %500 = vset.pattern.permute.xlu0 1
        %501 = vperm.xlu0 %500, %v417
        %v502 = vpop.permute.xlu0 %501
        %504 = vset.pattern.permute.xlu0 1
        %505 = vperm.xlu0 %504, %v418
        %v506 = vpop.permute.xlu0 %505
        %508 = vset.pattern.permute.xlu0 1
        %509 = vperm.xlu0 %508, %v419
        %v510 = vpop.permute.xlu0 %509
        %v512 = vlaneseq
        %v513 = vshrl.u32 %v512, 7
        %v514 = vsub.s32 1, %v513
        %v515 = vrot.slane %v411, %v514
        %v516 = vmul.f32 %v482, %v515
        %v517 = vmul.f32 %v486, %v515
        %v518 = vmul.f32 %v490, %v515
        %v519 = vmul.f32 %v494, %v515
        %v520 = vmul.f32 %v498, %v515
        %v521 = vmul.f32 %v502, %v515
        %v522 = vmul.f32 %v506, %v515
        %v523 = vmul.f32 %v510, %v515
        %v524 = vadd.f32 %v472, %v516
        %v525 = vadd.f32 %v473, %v517
        %v526 = vadd.f32 %v474, %v518
        %v527 = vadd.f32 %v475, %v519
        %v528 = vadd.f32 %v476, %v520
        %v529 = vadd.f32 %v477, %v521
        %v530 = vadd.f32 %v478, %v522
        %v531 = vadd.f32 %v479, %v523
        %532 = vset.pattern.permute.xlu0 2
        %533 = vperm.xlu0 %532, %v412
        %v534 = vpop.permute.xlu0 %533
        %536 = vset.pattern.permute.xlu0 2
        %537 = vperm.xlu0 %536, %v413
        %v538 = vpop.permute.xlu0 %537
        %540 = vset.pattern.permute.xlu0 2
        %541 = vperm.xlu0 %540, %v414
        %v542 = vpop.permute.xlu0 %541
        %544 = vset.pattern.permute.xlu0 2
        %545 = vperm.xlu0 %544, %v415
        %v546 = vpop.permute.xlu0 %545
        %548 = vset.pattern.permute.xlu0 2
        %549 = vperm.xlu0 %548, %v416
        %v550 = vpop.permute.xlu0 %549
        %552 = vset.pattern.permute.xlu0 2
        %553 = vperm.xlu0 %552, %v417
        %v554 = vpop.permute.xlu0 %553
        %556 = vset.pattern.permute.xlu0 2
        %557 = vperm.xlu0 %556, %v418
        %v558 = vpop.permute.xlu0 %557
        %560 = vset.pattern.permute.xlu0 2
        %561 = vperm.xlu0 %560, %v419
        %v562 = vpop.permute.xlu0 %561
        %v564 = vlaneseq
        %v565 = vshrl.u32 %v564, 7
        %v566 = vsub.s32 2, %v565
        %v567 = vrot.slane %v411, %v566
        %v568 = vmul.f32 %v534, %v567
        %v569 = vmul.f32 %v538, %v567
        %v570 = vmul.f32 %v542, %v567
        %v571 = vmul.f32 %v546, %v567
        %v572 = vmul.f32 %v550, %v567
        %v573 = vmul.f32 %v554, %v567
        %v574 = vmul.f32 %v558, %v567
        %v575 = vmul.f32 %v562, %v567
        %v576 = vadd.f32 %v524, %v568
        %v577 = vadd.f32 %v525, %v569
        %v578 = vadd.f32 %v526, %v570
        %v579 = vadd.f32 %v527, %v571
        %v580 = vadd.f32 %v528, %v572
        %v581 = vadd.f32 %v529, %v573
        %v582 = vadd.f32 %v530, %v574
        %v583 = vadd.f32 %v531, %v575
        %585 = vset.pattern.permute.xlu0 0
        %586 = vperm.xlu0 %585, %v420
        %v587 = vpop.permute.xlu0 %586
        %590 = vset.pattern.permute.xlu0 0
        %591 = vperm.xlu0 %590, %v421
        %v592 = vpop.permute.xlu0 %591
        %595 = vset.pattern.permute.xlu0 0
        %596 = vperm.xlu0 %595, %v422
        %v597 = vpop.permute.xlu0 %596
        %600 = vset.pattern.permute.xlu0 0
        %601 = vperm.xlu0 %600, %v423
        %v602 = vpop.permute.xlu0 %601
        %605 = vset.pattern.permute.xlu0 0
        %606 = vperm.xlu0 %605, %v424
        %v607 = vpop.permute.xlu0 %606
        %610 = vset.pattern.permute.xlu0 0
        %611 = vperm.xlu0 %610, %v425
        %v612 = vpop.permute.xlu0 %611
        %615 = vset.pattern.permute.xlu0 0
        %616 = vperm.xlu0 %615, %v426
        %v617 = vpop.permute.xlu0 %616
        %620 = vset.pattern.permute.xlu0 0
        %621 = vperm.xlu0 %620, %v427
        %v622 = vpop.permute.xlu0 %621
        %v624 = vadd.f32 %v576, %v587
        %v625 = vadd.f32 %v577, %v592
        %v626 = vadd.f32 %v578, %v597
        %v627 = vadd.f32 %v579, %v602
        %v628 = vadd.f32 %v580, %v607
        %v629 = vadd.f32 %v581, %v612
        %v630 = vadd.f32 %v582, %v617
        %v631 = vadd.f32 %v583, %v622
        %v632 = vmax.f32 %v624, 0.0
        %v633 = vmax.f32 %v625, 0.0
        %v634 = vmax.f32 %v626, 0.0
        %v635 = vmax.f32 %v627, 0.0
        %v636 = vmax.f32 %v628, 0.0
        %v637 = vmax.f32 %v629, 0.0
        %v638 = vmax.f32 %v630, 0.0
        %v639 = vmax.f32 %v631, 0.0
        %v640 = vpack.c.bf16 %v633, %v632
        %v641 = vpack.c.bf16 %v635, %v634
        %v642 = vpack.c.bf16 %v637, %v636
        %v643 = vpack.c.bf16 %v639, %v638
        %v644 = vld [vmem:[%s3] sm:$0xf]
        %v645 = vld [vmem:[%s3 + $0x4] sm:$0xf]
        %v646 = vld [vmem:[%s3 + $0x8] sm:$0xf]
        %v647 = vld [vmem:[%s3 + $0xc] sm:$0xf]
        %v648 = vld [vmem:[%s3 + $0x10] sm:$0xf]
        %v649 = vld [vmem:[%s3 + $0x14] sm:$0xf]
        %v650 = vld [vmem:[%s3 + $0x18] sm:$0xf]
        %v651 = vld [vmem:[%s3 + $0x1c] sm:$0xf]
        %v652 = vld [vmem:[%s4] sm:$0xff]
        %v653 = vld [vmem:[%s4 + $0x8] sm:$0xff]
        %v654 = vld [vmem:[%s4 + $0x10] sm:$0xff]
        %v655 = vld [vmem:[%s4 + $0x18] sm:$0xff]
        %v656 = vld [vmem:[%s4 + $0x20] sm:$0xff]
        %v657 = vld [vmem:[%s4 + $0x28] sm:$0xff]
        %v658 = vld [vmem:[%s4 + $0x30] sm:$0xff]
        %v659 = vld [vmem:[%s4 + $0x38] sm:$0xff]
        %661 = vset.pattern.permute.xlu0 0
        %662 = vperm.xlu0 %661, %v652
        %v663 = vpop.permute.xlu0 %662
        %666 = vset.pattern.permute.xlu0 0
        %667 = vperm.xlu0 %666, %v653
        %v668 = vpop.permute.xlu0 %667
        %671 = vset.pattern.permute.xlu0 0
        %672 = vperm.xlu0 %671, %v654
        %v673 = vpop.permute.xlu0 %672
        %676 = vset.pattern.permute.xlu0 0
        %677 = vperm.xlu0 %676, %v655
        %v678 = vpop.permute.xlu0 %677
        %681 = vset.pattern.permute.xlu0 0
        %682 = vperm.xlu0 %681, %v656
        %v683 = vpop.permute.xlu0 %682
        %686 = vset.pattern.permute.xlu0 0
        %687 = vperm.xlu0 %686, %v657
        %v688 = vpop.permute.xlu0 %687
        %691 = vset.pattern.permute.xlu0 0
        %692 = vperm.xlu0 %691, %v658
        %v693 = vpop.permute.xlu0 %692
        %696 = vset.pattern.permute.xlu0 0
        %697 = vperm.xlu0 %696, %v659
        %v698 = vpop.permute.xlu0 %697
        %v708 = vunpack.c.l.b16 %v644
        %v709 = vunpack.c.l.b16 %v645
        %v710 = vunpack.c.l.b16 %v646
        %v711 = vunpack.c.l.b16 %v647
        %v712 = vunpack.c.l.b16 %v648
        %v713 = vunpack.c.l.b16 %v649
        %v714 = vunpack.c.l.b16 %v650
        %v715 = vunpack.c.l.b16 %v651
        %v716 = vpack.c.b16 %v709, %v708
        %v717 = vpack.c.b16 %v711, %v710
        %v718 = vpack.c.b16 %v713, %v712
        %v719 = vpack.c.b16 %v715, %v714
        %vm720 = vcmask 523264
        %v722 = vsel %vm720, %v716, 0
        %v725 = vsel %vm720, %v717, 0
        %v728 = vsel %vm720, %v718, 0
        %v731 = vsel %vm720, %v719, 0
        %733 = vmatprep.subr.bf16.mxu0 0
        %734 = vmatpush1.bf16.msra.mxu0 %v640
        %735 = vmatprep.subr.bf16.mxu0 0
        %736 = vmatpush1.bf16.msra.mxu0 %v641
        %737 = vmatprep.subr.bf16.mxu0 0
        %738 = vmatpush1.bf16.msra.mxu0 %v642
        %739 = vmatprep.subr.bf16.mxu0 0
        %740 = vmatpush1.bf16.msra.mxu0 %v643
        %741 = vmatprep.subr.bf16.mxu0 0
        %742 = vmatpush1.bf16.msra.mxu0 0
        %743 = vmatprep.subr.bf16.mxu0 0
        %744 = vmatpush1.bf16.msra.mxu0 0
        %745 = vmatprep.subr.bf16.mxu0 0
        %746 = vmatpush1.bf16.msra.mxu0 0
        %747 = vmatprep.subr.bf16.mxu0 0
        %748 = vmatpush1.bf16.msra.mxu0 0
        %749 = vmatprep.subr.bf16.mxu0 0
        %750 = vmatpush1.bf16.msra.mxu0 0
        %751 = vmatprep.subr.bf16.mxu0 0
        %752 = vmatpush1.bf16.msra.mxu0 0
        %753 = vmatprep.subr.bf16.mxu0 0
        %754 = vmatpush1.bf16.msra.mxu0 0
        %755 = vmatprep.subr.bf16.mxu0 0
        %756 = vmatpush1.bf16.msra.mxu0 0
        %757 = vmatprep.subr.bf16.mxu0 0
        %758 = vmatpush1.bf16.msra.mxu0 0
        %759 = vmatprep.subr.bf16.mxu0 0
        %760 = vmatpush1.bf16.msra.mxu0 0
        %761 = vmatprep.subr.bf16.mxu0 0
        %762 = vmatpush1.bf16.msra.mxu0 0
        %763 = vmatprep.subr.bf16.mxu0 0
        %764 = vmatpush1.bf16.msra.mxu0 0
        %765 = vmatprep.mubr.bf16.mxu0 0
        %766 = vmatmul.mubr.bf16.gmra.mrb[0].mxu0 %v722
        %v767 = vpop.f32.mrb[0].mxu0
        %v768 = vadd.f32 %v663, %v767
        %v769 = vpop.f32.mrb[0].mxu0
        %v770 = vpop.f32.mrb[0].mxu0
        %v771 = vadd.f32 %v668, %v770
        %v772 = vpop.f32.mrb[0].mxu0
        %773 = vmatprep.mubr.bf16.mxu0 0
        %774 = vmatmul.mubr.bf16.gmra.mrb[0].mxu0 %v725
        %v775 = vpop.f32.mrb[0].mxu0
        %v776 = vadd.f32 %v673, %v775
        %v777 = vpop.f32.mrb[0].mxu0
        %v778 = vpop.f32.mrb[0].mxu0
        %v779 = vadd.f32 %v678, %v778
        %v780 = vpop.f32.mrb[0].mxu0
        %781 = vmatprep.mubr.bf16.mxu0 0
        %782 = vmatmul.mubr.bf16.gmra.mrb[0].mxu0 %v728
        %v783 = vpop.f32.mrb[0].mxu0
        %v784 = vadd.f32 %v683, %v783
        %v785 = vpop.f32.mrb[0].mxu0
        %v786 = vpop.f32.mrb[0].mxu0
        %v787 = vadd.f32 %v688, %v786
        %v788 = vpop.f32.mrb[0].mxu0
        %789 = vmatprep.mubr.bf16.mxu0 0
        %790 = vmatmul.mubr.bf16.gmra.mrb[0].mxu0 %v731
        %v791 = vpop.f32.mrb[0].mxu0
        %v792 = vadd.f32 %v693, %v791
        %v793 = vpop.f32.mrb[0].mxu0
        %v794 = vpop.f32.mrb[0].mxu0
        %v795 = vadd.f32 %v698, %v794
        %v796 = vpop.f32.mrb[0].mxu0
        %797 = vdwg.mxu0
        %v798 = vmax.f32 %v768, 0.0
        %v799 = vmax.f32 %v771, 0.0
        %v800 = vmax.f32 %v776, 0.0
        %v801 = vmax.f32 %v779, 0.0
        %v802 = vmax.f32 %v784, 0.0
        %v803 = vmax.f32 %v787, 0.0
        %v804 = vmax.f32 %v792, 0.0
        %v805 = vmax.f32 %v795, 0.0
        %v806 = vpack.c.bf16 %v799, %v798
        %v807 = vpack.c.bf16 %v801, %v800
        %v808 = vpack.c.bf16 %v803, %v802
        %v809 = vpack.c.bf16 %v805, %v804
        %v810 = vld [vmem:[%s5] sm:$0xf]
        %v811 = vld [vmem:[%s5 + $0x4] sm:$0xf]
        %v812 = vld [vmem:[%s5 + $0x8] sm:$0xf]
        %v813 = vld [vmem:[%s5 + $0xc] sm:$0xf]
        %v814 = vld [vmem:[%s5 + $0x10] sm:$0xf]
        %v815 = vld [vmem:[%s5 + $0x14] sm:$0xf]
        %v816 = vld [vmem:[%s5 + $0x18] sm:$0xf]
        %v817 = vld [vmem:[%s5 + $0x1c] sm:$0xf]
        %v818 = vld [vmem:[%s6] sm:$0xff]
        %v819 = vld [vmem:[%s6 + $0x8] sm:$0xff]
        %v820 = vld [vmem:[%s6 + $0x10] sm:$0xff]
        %v821 = vld [vmem:[%s6 + $0x18] sm:$0xff]
        %v822 = vld [vmem:[%s6 + $0x20] sm:$0xff]
        %v823 = vld [vmem:[%s6 + $0x28] sm:$0xff]
        %v824 = vld [vmem:[%s6 + $0x30] sm:$0xff]
        %v825 = vld [vmem:[%s6 + $0x38] sm:$0xff]
        %827 = vset.pattern.permute.xlu0 0
        %828 = vperm.xlu0 %827, %v818
        %v829 = vpop.permute.xlu0 %828
        %832 = vset.pattern.permute.xlu0 0
        %833 = vperm.xlu0 %832, %v819
        %v834 = vpop.permute.xlu0 %833
        %837 = vset.pattern.permute.xlu0 0
        %838 = vperm.xlu0 %837, %v820
        %v839 = vpop.permute.xlu0 %838
        %842 = vset.pattern.permute.xlu0 0
        %843 = vperm.xlu0 %842, %v821
        %v844 = vpop.permute.xlu0 %843
        %847 = vset.pattern.permute.xlu0 0
        %848 = vperm.xlu0 %847, %v822
        %v849 = vpop.permute.xlu0 %848
        %852 = vset.pattern.permute.xlu0 0
        %853 = vperm.xlu0 %852, %v823
        %v854 = vpop.permute.xlu0 %853
        %857 = vset.pattern.permute.xlu0 0
        %858 = vperm.xlu0 %857, %v824
        %v859 = vpop.permute.xlu0 %858
        %862 = vset.pattern.permute.xlu0 0
        %863 = vperm.xlu0 %862, %v825
        %v864 = vpop.permute.xlu0 %863
        %v874 = vunpack.c.l.b16 %v810
        %v875 = vunpack.c.l.b16 %v811
        %v876 = vunpack.c.l.b16 %v812
        %v877 = vunpack.c.l.b16 %v813
        %v878 = vunpack.c.l.b16 %v814
        %v879 = vunpack.c.l.b16 %v815
        %v880 = vunpack.c.l.b16 %v816
        %v881 = vunpack.c.l.b16 %v817
        %v882 = vpack.c.b16 %v875, %v874
        %v883 = vpack.c.b16 %v877, %v876
        %v884 = vpack.c.b16 %v879, %v878
        %v885 = vpack.c.b16 %v881, %v880
        %v887 = vsel %vm720, %v882, 0
        %v890 = vsel %vm720, %v883, 0
        %v893 = vsel %vm720, %v884, 0
        %v896 = vsel %vm720, %v885, 0
        %898 = vmatprep.subr.bf16.mxu0 0
        %899 = vmatpush1.bf16.msra.mxu0 %v806
        %900 = vmatprep.subr.bf16.mxu0 0
        %901 = vmatpush1.bf16.msra.mxu0 %v807
        %902 = vmatprep.subr.bf16.mxu0 0
        %903 = vmatpush1.bf16.msra.mxu0 %v808
        %904 = vmatprep.subr.bf16.mxu0 0
        %905 = vmatpush1.bf16.msra.mxu0 %v809
        %906 = vmatprep.subr.bf16.mxu0 0
        %907 = vmatpush1.bf16.msra.mxu0 0
        %908 = vmatprep.subr.bf16.mxu0 0
        %909 = vmatpush1.bf16.msra.mxu0 0
        %910 = vmatprep.subr.bf16.mxu0 0
        %911 = vmatpush1.bf16.msra.mxu0 0
        %912 = vmatprep.subr.bf16.mxu0 0
        %913 = vmatpush1.bf16.msra.mxu0 0
        %914 = vmatprep.subr.bf16.mxu0 0
        %915 = vmatpush1.bf16.msra.mxu0 0
        %916 = vmatprep.subr.bf16.mxu0 0
        %917 = vmatpush1.bf16.msra.mxu0 0
        %918 = vmatprep.subr.bf16.mxu0 0
        %919 = vmatpush1.bf16.msra.mxu0 0
        %920 = vmatprep.subr.bf16.mxu0 0
        %921 = vmatpush1.bf16.msra.mxu0 0
        %922 = vmatprep.subr.bf16.mxu0 0
        %923 = vmatpush1.bf16.msra.mxu0 0
        %924 = vmatprep.subr.bf16.mxu0 0
        %925 = vmatpush1.bf16.msra.mxu0 0
        %926 = vmatprep.subr.bf16.mxu0 0
        %927 = vmatpush1.bf16.msra.mxu0 0
        %928 = vmatprep.subr.bf16.mxu0 0
        %929 = vmatpush1.bf16.msra.mxu0 0
        %930 = vmatprep.mubr.bf16.mxu0 0
        %931 = vmatmul.mubr.bf16.gmra.mrb[0].mxu0 %v887
        %v932 = vpop.f32.mrb[0].mxu0
        %v933 = vadd.f32 %v829, %v932
        %v934 = vpop.f32.mrb[0].mxu0
        %v935 = vpop.f32.mrb[0].mxu0
        %v936 = vadd.f32 %v834, %v935
        %v937 = vpop.f32.mrb[0].mxu0
        %938 = vmatprep.mubr.bf16.mxu0 0
        %939 = vmatmul.mubr.bf16.gmra.mrb[0].mxu0 %v890
        %v940 = vpop.f32.mrb[0].mxu0
        %v941 = vadd.f32 %v839, %v940
        %v942 = vpop.f32.mrb[0].mxu0
        %v943 = vpop.f32.mrb[0].mxu0
        %v944 = vadd.f32 %v844, %v943
        %v945 = vpop.f32.mrb[0].mxu0
        %946 = vmatprep.mubr.bf16.mxu0 0
        %947 = vmatmul.mubr.bf16.gmra.mrb[0].mxu0 %v893
        %v948 = vpop.f32.mrb[0].mxu0
        %v949 = vadd.f32 %v849, %v948
        %v950 = vpop.f32.mrb[0].mxu0
        %v951 = vpop.f32.mrb[0].mxu0
        %v952 = vadd.f32 %v854, %v951
        %v953 = vpop.f32.mrb[0].mxu0
        %954 = vmatprep.mubr.bf16.mxu0 0
        %955 = vmatmul.mubr.bf16.gmra.mrb[0].mxu0 %v896
        %v956 = vpop.f32.mrb[0].mxu0
        %v957 = vadd.f32 %v859, %v956
        %v958 = vpop.f32.mrb[0].mxu0
        %v959 = vpop.f32.mrb[0].mxu0
        %v960 = vadd.f32 %v864, %v959
        %v961 = vpop.f32.mrb[0].mxu0
        %962 = vdwg.mxu0
        %v963 = vmax.f32 %v933, 0.0
        %v964 = vmax.f32 %v936, 0.0
        %v965 = vmax.f32 %v941, 0.0
        %v966 = vmax.f32 %v944, 0.0
        %v967 = vmax.f32 %v949, 0.0
        %v968 = vmax.f32 %v952, 0.0
        %v969 = vmax.f32 %v957, 0.0
        %v970 = vmax.f32 %v960, 0.0
        %v971 = vpack.c.bf16 %v964, %v963
        %v972 = vpack.c.bf16 %v966, %v965
        %v973 = vpack.c.bf16 %v968, %v967
        %v974 = vpack.c.bf16 %v970, %v969
        %v975 = vld [vmem:[%s7] sm:$0xf]
        %v976 = vld [vmem:[%s7 + $0x4] sm:$0xf]
        %v977 = vld [vmem:[%s7 + $0x8] sm:$0xf]
        %v978 = vld [vmem:[%s7 + $0xc] sm:$0xf]
        %v979 = vld [vmem:[%s7 + $0x10] sm:$0xf]
        %v980 = vld [vmem:[%s7 + $0x14] sm:$0xf]
        %v981 = vld [vmem:[%s7 + $0x18] sm:$0xf]
        %v982 = vld [vmem:[%s7 + $0x1c] sm:$0xf]
        %v983 = vld [vmem:[%s7 + $0x20] sm:$0xf]
        %v984 = vld [vmem:[%s7 + $0x24] sm:$0xf]
        %v985 = vld [vmem:[%s7 + $0x28] sm:$0xf]
        %v986 = vld [vmem:[%s7 + $0x2c] sm:$0xf]
        %v987 = vld [vmem:[%s7 + $0x30] sm:$0xf]
        %v988 = vld [vmem:[%s7 + $0x34] sm:$0xf]
        %v989 = vld [vmem:[%s7 + $0x38] sm:$0xf]
        %v990 = vld [vmem:[%s7 + $0x3c] sm:$0xf]
        %v991 = vld [vmem:[%s8] sm:$0xff]
        %v992 = vld [vmem:[%s8 + $0x8] sm:$0xff]
        %v993 = vld [vmem:[%s8 + $0x10] sm:$0xff]
        %v994 = vld [vmem:[%s8 + $0x18] sm:$0xff]
        %v995 = vld [vmem:[%s8 + $0x20] sm:$0xff]
        %v996 = vld [vmem:[%s8 + $0x28] sm:$0xff]
        %v997 = vld [vmem:[%s8 + $0x30] sm:$0xff]
        %v998 = vld [vmem:[%s8 + $0x38] sm:$0xff]
        %v999 = vld [vmem:[%s8 + $0x40] sm:$0xff]
        %v1000 = vld [vmem:[%s8 + $0x48] sm:$0xff]
        %v1001 = vld [vmem:[%s8 + $0x50] sm:$0xff]
        %v1002 = vld [vmem:[%s8 + $0x58] sm:$0xff]
        %v1003 = vld [vmem:[%s8 + $0x60] sm:$0xff]
        %v1004 = vld [vmem:[%s8 + $0x68] sm:$0xff]
        %v1005 = vld [vmem:[%s8 + $0x70] sm:$0xff]
        %v1006 = vld [vmem:[%s8 + $0x78] sm:$0xff]
        %1008 = vset.pattern.permute.xlu0 0
        %1009 = vperm.xlu0 %1008, %v991
        %v1010 = vpop.permute.xlu0 %1009
        %1013 = vset.pattern.permute.xlu0 0
        %1014 = vperm.xlu0 %1013, %v992
        %v1015 = vpop.permute.xlu0 %1014
        %1018 = vset.pattern.permute.xlu0 0
        %1019 = vperm.xlu0 %1018, %v993
        %v1020 = vpop.permute.xlu0 %1019
        %1023 = vset.pattern.permute.xlu0 0
        %1024 = vperm.xlu0 %1023, %v994
        %v1025 = vpop.permute.xlu0 %1024
        %1028 = vset.pattern.permute.xlu0 0
        %1029 = vperm.xlu0 %1028, %v995
        %v1030 = vpop.permute.xlu0 %1029
        %1033 = vset.pattern.permute.xlu0 0
        %1034 = vperm.xlu0 %1033, %v996
        %v1035 = vpop.permute.xlu0 %1034
        %1038 = vset.pattern.permute.xlu0 0
        %1039 = vperm.xlu0 %1038, %v997
        %v1040 = vpop.permute.xlu0 %1039
        %1043 = vset.pattern.permute.xlu0 0
        %1044 = vperm.xlu0 %1043, %v998
        %v1045 = vpop.permute.xlu0 %1044
        %1048 = vset.pattern.permute.xlu0 0
        %1049 = vperm.xlu0 %1048, %v999
        %v1050 = vpop.permute.xlu0 %1049
        %1053 = vset.pattern.permute.xlu0 0
        %1054 = vperm.xlu0 %1053, %v1000
        %v1055 = vpop.permute.xlu0 %1054
        %1058 = vset.pattern.permute.xlu0 0
        %1059 = vperm.xlu0 %1058, %v1001
        %v1060 = vpop.permute.xlu0 %1059
        %1063 = vset.pattern.permute.xlu0 0
        %1064 = vperm.xlu0 %1063, %v1002
        %v1065 = vpop.permute.xlu0 %1064
        %1068 = vset.pattern.permute.xlu0 0
        %1069 = vperm.xlu0 %1068, %v1003
        %v1070 = vpop.permute.xlu0 %1069
        %1073 = vset.pattern.permute.xlu0 0
        %1074 = vperm.xlu0 %1073, %v1004
        %v1075 = vpop.permute.xlu0 %1074
        %1078 = vset.pattern.permute.xlu0 0
        %1079 = vperm.xlu0 %1078, %v1005
        %v1080 = vpop.permute.xlu0 %1079
        %1083 = vset.pattern.permute.xlu0 0
        %1084 = vperm.xlu0 %1083, %v1006
        %v1085 = vpop.permute.xlu0 %1084
        %v1103 = vunpack.c.l.b16 %v975
        %v1104 = vunpack.c.l.b16 %v976
        %v1105 = vunpack.c.l.b16 %v977
        %v1106 = vunpack.c.l.b16 %v978
        %v1107 = vunpack.c.l.b16 %v979
        %v1108 = vunpack.c.l.b16 %v980
        %v1109 = vunpack.c.l.b16 %v981
        %v1110 = vunpack.c.l.b16 %v982
        %v1111 = vunpack.c.l.b16 %v983
        %v1112 = vunpack.c.l.b16 %v984
        %v1113 = vunpack.c.l.b16 %v985
        %v1114 = vunpack.c.l.b16 %v986
        %v1115 = vunpack.c.l.b16 %v987
        %v1116 = vunpack.c.l.b16 %v988
        %v1117 = vunpack.c.l.b16 %v989
        %v1118 = vunpack.c.l.b16 %v990
        %v1119 = vpack.c.b16 %v1104, %v1103
        %v1120 = vpack.c.b16 %v1106, %v1105
        %v1121 = vpack.c.b16 %v1108, %v1107
        %v1122 = vpack.c.b16 %v1110, %v1109
        %v1123 = vpack.c.b16 %v1112, %v1111
        %v1124 = vpack.c.b16 %v1114, %v1113
        %v1125 = vpack.c.b16 %v1116, %v1115
        %v1126 = vpack.c.b16 %v1118, %v1117
        %v1128 = vsel %vm720, %v1119, 0
        %v1131 = vsel %vm720, %v1120, 0
        %v1134 = vsel %vm720, %v1121, 0
        %v1137 = vsel %vm720, %v1122, 0
        %v1140 = vsel %vm720, %v1123, 0
        %v1143 = vsel %vm720, %v1124, 0
        %v1146 = vsel %vm720, %v1125, 0
        %v1149 = vsel %vm720, %v1126, 0
        %1151 = vmatprep.subr.bf16.mxu0 0
        %1152 = vmatpush1.bf16.msra.mxu0 %v971
        %1153 = vmatprep.subr.bf16.mxu0 0
        %1154 = vmatpush1.bf16.msra.mxu0 %v972
        %1155 = vmatprep.subr.bf16.mxu0 0
        %1156 = vmatpush1.bf16.msra.mxu0 %v973
        %1157 = vmatprep.subr.bf16.mxu0 0
        %1158 = vmatpush1.bf16.msra.mxu0 %v974
        %1159 = vmatprep.subr.bf16.mxu0 0
        %1160 = vmatpush1.bf16.msra.mxu0 0
        %1161 = vmatprep.subr.bf16.mxu0 0
        %1162 = vmatpush1.bf16.msra.mxu0 0
        %1163 = vmatprep.subr.bf16.mxu0 0
        %1164 = vmatpush1.bf16.msra.mxu0 0
        %1165 = vmatprep.subr.bf16.mxu0 0
        %1166 = vmatpush1.bf16.msra.mxu0 0
        %1167 = vmatprep.subr.bf16.mxu0 0
        %1168 = vmatpush1.bf16.msra.mxu0 0
        %1169 = vmatprep.subr.bf16.mxu0 0
        %1170 = vmatpush1.bf16.msra.mxu0 0
        %1171 = vmatprep.subr.bf16.mxu0 0
        %1172 = vmatpush1.bf16.msra.mxu0 0
        %1173 = vmatprep.subr.bf16.mxu0 0
        %1174 = vmatpush1.bf16.msra.mxu0 0
        %1175 = vmatprep.subr.bf16.mxu0 0
        %1176 = vmatpush1.bf16.msra.mxu0 0
        %1177 = vmatprep.subr.bf16.mxu0 0
        %1178 = vmatpush1.bf16.msra.mxu0 0
        %1179 = vmatprep.subr.bf16.mxu0 0
        %1180 = vmatpush1.bf16.msra.mxu0 0
        %1181 = vmatprep.subr.bf16.mxu0 0
        %1182 = vmatpush1.bf16.msra.mxu0 0
        %1183 = vmatprep.mubr.bf16.mxu0 0
        %1184 = vmatmul.mubr.bf16.gmra.mrb[0].mxu0 %v1128
        %v1185 = vpop.f32.mrb[0].mxu0
        %v1186 = vadd.f32 %v1010, %v1185
        %v1187 = vpop.f32.mrb[0].mxu0
        %v1188 = vpop.f32.mrb[0].mxu0
        %v1189 = vadd.f32 %v1015, %v1188
        %v1190 = vpop.f32.mrb[0].mxu0
        %1191 = vmatprep.mubr.bf16.mxu0 0
        %1192 = vmatmul.mubr.bf16.gmra.mrb[0].mxu0 %v1131
        %v1193 = vpop.f32.mrb[0].mxu0
        %v1194 = vadd.f32 %v1020, %v1193
        %v1195 = vpop.f32.mrb[0].mxu0
        %v1196 = vpop.f32.mrb[0].mxu0
        %v1197 = vadd.f32 %v1025, %v1196
        %v1198 = vpop.f32.mrb[0].mxu0
        %1199 = vmatprep.mubr.bf16.mxu0 0
        %1200 = vmatmul.mubr.bf16.gmra.mrb[0].mxu0 %v1134
        %v1201 = vpop.f32.mrb[0].mxu0
        %v1202 = vadd.f32 %v1030, %v1201
        %v1203 = vpop.f32.mrb[0].mxu0
        %v1204 = vpop.f32.mrb[0].mxu0
        %v1205 = vadd.f32 %v1035, %v1204
        %v1206 = vpop.f32.mrb[0].mxu0
        %1207 = vmatprep.mubr.bf16.mxu0 0
        %1208 = vmatmul.mubr.bf16.gmra.mrb[0].mxu0 %v1137
        %v1209 = vpop.f32.mrb[0].mxu0
        %v1210 = vadd.f32 %v1040, %v1209
        %v1211 = vpop.f32.mrb[0].mxu0
        %v1212 = vpop.f32.mrb[0].mxu0
        %v1213 = vadd.f32 %v1045, %v1212
        %v1214 = vpop.f32.mrb[0].mxu0
        %1215 = vmatprep.mubr.bf16.mxu0 0
        %1216 = vmatmul.mubr.bf16.gmra.mrb[0].mxu0 %v1140
        %v1217 = vpop.f32.mrb[0].mxu0
        %v1218 = vadd.f32 %v1050, %v1217
        %v1219 = vpop.f32.mrb[0].mxu0
        %v1220 = vpop.f32.mrb[0].mxu0
        %v1221 = vadd.f32 %v1055, %v1220
        %v1222 = vpop.f32.mrb[0].mxu0
        %1223 = vmatprep.mubr.bf16.mxu0 0
        %1224 = vmatmul.mubr.bf16.gmra.mrb[0].mxu0 %v1143
        %v1225 = vpop.f32.mrb[0].mxu0
        %v1226 = vadd.f32 %v1060, %v1225
        %v1227 = vpop.f32.mrb[0].mxu0
        %v1228 = vpop.f32.mrb[0].mxu0
        %v1229 = vadd.f32 %v1065, %v1228
        %v1230 = vpop.f32.mrb[0].mxu0
        %1231 = vmatprep.mubr.bf16.mxu0 0
        %1232 = vmatmul.mubr.bf16.gmra.mrb[0].mxu0 %v1146
        %v1233 = vpop.f32.mrb[0].mxu0
        %v1234 = vadd.f32 %v1070, %v1233
        %v1235 = vpop.f32.mrb[0].mxu0
        %v1236 = vpop.f32.mrb[0].mxu0
        %v1237 = vadd.f32 %v1075, %v1236
        %v1238 = vpop.f32.mrb[0].mxu0
        %1239 = vmatprep.mubr.bf16.mxu0 0
        %1240 = vmatmul.mubr.bf16.gmra.mrb[0].mxu0 %v1149
        %v1241 = vpop.f32.mrb[0].mxu0
        %v1242 = vadd.f32 %v1080, %v1241
        %v1243 = vpop.f32.mrb[0].mxu0
        %v1244 = vpop.f32.mrb[0].mxu0
        %v1245 = vadd.f32 %v1085, %v1244
        %v1246 = vpop.f32.mrb[0].mxu0
        %1247 = vdwg.mxu0
        %v1248 = vmax.f32 %v1186, 0.0
        %v1249 = vmax.f32 %v1189, 0.0
        %v1250 = vmax.f32 %v1194, 0.0
        %v1251 = vmax.f32 %v1197, 0.0
        %v1252 = vmax.f32 %v1202, 0.0
        %v1253 = vmax.f32 %v1205, 0.0
        %v1254 = vmax.f32 %v1210, 0.0
        %v1255 = vmax.f32 %v1213, 0.0
        %v1256 = vmax.f32 %v1218, 0.0
        %v1257 = vmax.f32 %v1221, 0.0
        %v1258 = vmax.f32 %v1226, 0.0
        %v1259 = vmax.f32 %v1229, 0.0
        %v1260 = vmax.f32 %v1234, 0.0
        %v1261 = vmax.f32 %v1237, 0.0
        %v1262 = vmax.f32 %v1242, 0.0
        %v1263 = vmax.f32 %v1245, 0.0
        %v1264 = vpack.c.bf16 %v1249, %v1248
        %v1265 = vpack.c.bf16 %v1251, %v1250
        %v1266 = vpack.c.bf16 %v1253, %v1252
        %v1267 = vpack.c.bf16 %v1255, %v1254
        %v1268 = vpack.c.bf16 %v1257, %v1256
        %v1269 = vpack.c.bf16 %v1259, %v1258
        %v1270 = vpack.c.bf16 %v1261, %v1260
        %v1271 = vpack.c.bf16 %v1263, %v1262
        %v1272 = vld [vmem:[%s9] sm:$0xf]
        %v1273 = vld [vmem:[%s9 + $0x4] sm:$0xf]
        %v1274 = vld [vmem:[%s9 + $0x8] sm:$0xf]
        %v1275 = vld [vmem:[%s9 + $0xc] sm:$0xf]
        %v1276 = vld [vmem:[%s9 + $0x10] sm:$0xf]
        %v1277 = vld [vmem:[%s9 + $0x14] sm:$0xf]
        %v1278 = vld [vmem:[%s9 + $0x18] sm:$0xf]
        %v1279 = vld [vmem:[%s9 + $0x1c] sm:$0xf]
        %v1280 = vld [vmem:[%s9 + $0x20] sm:$0xf]
        %v1281 = vld [vmem:[%s9 + $0x24] sm:$0xf]
        %v1282 = vld [vmem:[%s9 + $0x28] sm:$0xf]
        %v1283 = vld [vmem:[%s9 + $0x2c] sm:$0xf]
        %v1284 = vld [vmem:[%s9 + $0x30] sm:$0xf]
        %v1285 = vld [vmem:[%s9 + $0x34] sm:$0xf]
        %v1286 = vld [vmem:[%s9 + $0x38] sm:$0xf]
        %v1287 = vld [vmem:[%s9 + $0x3c] sm:$0xf]
        %v1288 = vld [vmem:[%s9 + $0x40] sm:$0xf]
        %v1289 = vld [vmem:[%s9 + $0x44] sm:$0xf]
        %v1290 = vld [vmem:[%s9 + $0x48] sm:$0xf]
        %v1291 = vld [vmem:[%s9 + $0x4c] sm:$0xf]
        %v1292 = vld [vmem:[%s9 + $0x50] sm:$0xf]
        %v1293 = vld [vmem:[%s9 + $0x54] sm:$0xf]
        %v1294 = vld [vmem:[%s9 + $0x58] sm:$0xf]
        %v1295 = vld [vmem:[%s9 + $0x5c] sm:$0xf]
        %v1296 = vld [vmem:[%s9 + $0x60] sm:$0xf]
        %v1297 = vld [vmem:[%s9 + $0x64] sm:$0xf]
        %v1298 = vld [vmem:[%s9 + $0x68] sm:$0xf]
        %v1299 = vld [vmem:[%s9 + $0x6c] sm:$0xf]
        %v1300 = vld [vmem:[%s9 + $0x70] sm:$0xf]
        %v1301 = vld [vmem:[%s9 + $0x74] sm:$0xf]
        %v1302 = vld [vmem:[%s9 + $0x78] sm:$0xf]
        %v1303 = vld [vmem:[%s9 + $0x7c] sm:$0xf]
        %v1304 = vld [vmem:[%s10] sm:$0xff]
        %v1305 = vld [vmem:[%s10 + $0x8] sm:$0xff]
        %v1306 = vld [vmem:[%s10 + $0x10] sm:$0xff]
        %v1307 = vld [vmem:[%s10 + $0x18] sm:$0xff]
        %v1308 = vld [vmem:[%s10 + $0x20] sm:$0xff]
        %v1309 = vld [vmem:[%s10 + $0x28] sm:$0xff]
        %v1310 = vld [vmem:[%s10 + $0x30] sm:$0xff]
        %v1311 = vld [vmem:[%s10 + $0x38] sm:$0xff]
        %v1312 = vld [vmem:[%s10 + $0x40] sm:$0xff]
        %v1313 = vld [vmem:[%s10 + $0x48] sm:$0xff]
        %v1314 = vld [vmem:[%s10 + $0x50] sm:$0xff]
        %v1315 = vld [vmem:[%s10 + $0x58] sm:$0xff]
        %v1316 = vld [vmem:[%s10 + $0x60] sm:$0xff]
        %v1317 = vld [vmem:[%s10 + $0x68] sm:$0xff]
        %v1318 = vld [vmem:[%s10 + $0x70] sm:$0xff]
        %v1319 = vld [vmem:[%s10 + $0x78] sm:$0xff]
        %v1320 = vld [vmem:[%s10 + $0x80] sm:$0xff]
        %v1321 = vld [vmem:[%s10 + $0x88] sm:$0xff]
        %v1322 = vld [vmem:[%s10 + $0x90] sm:$0xff]
        %v1323 = vld [vmem:[%s10 + $0x98] sm:$0xff]
        %v1324 = vld [vmem:[%s10 + $0xa0] sm:$0xff]
        %v1325 = vld [vmem:[%s10 + $0xa8] sm:$0xff]
        %v1326 = vld [vmem:[%s10 + $0xb0] sm:$0xff]
        %v1327 = vld [vmem:[%s10 + $0xb8] sm:$0xff]
        %v1328 = vld [vmem:[%s10 + $0xc0] sm:$0xff]
        %v1329 = vld [vmem:[%s10 + $0xc8] sm:$0xff]
        %v1330 = vld [vmem:[%s10 + $0xd0] sm:$0xff]
        %v1331 = vld [vmem:[%s10 + $0xd8] sm:$0xff]
        %v1332 = vld [vmem:[%s10 + $0xe0] sm:$0xff]
        %v1333 = vld [vmem:[%s10 + $0xe8] sm:$0xff]
        %v1334 = vld [vmem:[%s10 + $0xf0] sm:$0xff]
        %v1335 = vld [vmem:[%s10 + $0xf8] sm:$0xff]
        %1337 = vset.pattern.permute.xlu0 0
        %1338 = vperm.xlu0 %1337, %v1304
        %v1339 = vpop.permute.xlu0 %1338
        %1342 = vset.pattern.permute.xlu0 0
        %1343 = vperm.xlu0 %1342, %v1305
        %v1344 = vpop.permute.xlu0 %1343
        %1347 = vset.pattern.permute.xlu0 0
        %1348 = vperm.xlu0 %1347, %v1306
        %v1349 = vpop.permute.xlu0 %1348
        %1352 = vset.pattern.permute.xlu0 0
        %1353 = vperm.xlu0 %1352, %v1307
        %v1354 = vpop.permute.xlu0 %1353
        %1357 = vset.pattern.permute.xlu0 0
        %1358 = vperm.xlu0 %1357, %v1308
        %v1359 = vpop.permute.xlu0 %1358
        %1362 = vset.pattern.permute.xlu0 0
        %1363 = vperm.xlu0 %1362, %v1309
        %v1364 = vpop.permute.xlu0 %1363
        %1367 = vset.pattern.permute.xlu0 0
        %1368 = vperm.xlu0 %1367, %v1310
        %v1369 = vpop.permute.xlu0 %1368
        %1372 = vset.pattern.permute.xlu0 0
        %1373 = vperm.xlu0 %1372, %v1311
        %v1374 = vpop.permute.xlu0 %1373
        %1377 = vset.pattern.permute.xlu0 0
        %1378 = vperm.xlu0 %1377, %v1312
        %v1379 = vpop.permute.xlu0 %1378
        %1382 = vset.pattern.permute.xlu0 0
        %1383 = vperm.xlu0 %1382, %v1313
        %v1384 = vpop.permute.xlu0 %1383
        %1387 = vset.pattern.permute.xlu0 0
        %1388 = vperm.xlu0 %1387, %v1314
        %v1389 = vpop.permute.xlu0 %1388
        %1392 = vset.pattern.permute.xlu0 0
        %1393 = vperm.xlu0 %1392, %v1315
        %v1394 = vpop.permute.xlu0 %1393
        %1397 = vset.pattern.permute.xlu0 0
        %1398 = vperm.xlu0 %1397, %v1316
        %v1399 = vpop.permute.xlu0 %1398
        %1402 = vset.pattern.permute.xlu0 0
        %1403 = vperm.xlu0 %1402, %v1317
        %v1404 = vpop.permute.xlu0 %1403
        %1407 = vset.pattern.permute.xlu0 0
        %1408 = vperm.xlu0 %1407, %v1318
        %v1409 = vpop.permute.xlu0 %1408
        %1412 = vset.pattern.permute.xlu0 0
        %1413 = vperm.xlu0 %1412, %v1319
        %v1414 = vpop.permute.xlu0 %1413
        %1417 = vset.pattern.permute.xlu0 0
        %1418 = vperm.xlu0 %1417, %v1320
        %v1419 = vpop.permute.xlu0 %1418
        %1422 = vset.pattern.permute.xlu0 0
        %1423 = vperm.xlu0 %1422, %v1321
        %v1424 = vpop.permute.xlu0 %1423
        %1427 = vset.pattern.permute.xlu0 0
        %1428 = vperm.xlu0 %1427, %v1322
        %v1429 = vpop.permute.xlu0 %1428
        %1432 = vset.pattern.permute.xlu0 0
        %1433 = vperm.xlu0 %1432, %v1323
        %v1434 = vpop.permute.xlu0 %1433
        %1437 = vset.pattern.permute.xlu0 0
        %1438 = vperm.xlu0 %1437, %v1324
        %v1439 = vpop.permute.xlu0 %1438
        %1442 = vset.pattern.permute.xlu0 0
        %1443 = vperm.xlu0 %1442, %v1325
        %v1444 = vpop.permute.xlu0 %1443
        %1447 = vset.pattern.permute.xlu0 0
        %1448 = vperm.xlu0 %1447, %v1326
        %v1449 = vpop.permute.xlu0 %1448
        %1452 = vset.pattern.permute.xlu0 0
        %1453 = vperm.xlu0 %1452, %v1327
        %v1454 = vpop.permute.xlu0 %1453
        %1457 = vset.pattern.permute.xlu0 0
        %1458 = vperm.xlu0 %1457, %v1328
        %v1459 = vpop.permute.xlu0 %1458
        %1462 = vset.pattern.permute.xlu0 0
        %1463 = vperm.xlu0 %1462, %v1329
        %v1464 = vpop.permute.xlu0 %1463
        %1467 = vset.pattern.permute.xlu0 0
        %1468 = vperm.xlu0 %1467, %v1330
        %v1469 = vpop.permute.xlu0 %1468
        %1472 = vset.pattern.permute.xlu0 0
        %1473 = vperm.xlu0 %1472, %v1331
        %v1474 = vpop.permute.xlu0 %1473
        %1477 = vset.pattern.permute.xlu0 0
        %1478 = vperm.xlu0 %1477, %v1332
        %v1479 = vpop.permute.xlu0 %1478
        %1482 = vset.pattern.permute.xlu0 0
        %1483 = vperm.xlu0 %1482, %v1333
        %v1484 = vpop.permute.xlu0 %1483
        %1487 = vset.pattern.permute.xlu0 0
        %1488 = vperm.xlu0 %1487, %v1334
        %v1489 = vpop.permute.xlu0 %1488
        %1492 = vset.pattern.permute.xlu0 0
        %1493 = vperm.xlu0 %1492, %v1335
        %v1494 = vpop.permute.xlu0 %1493
        %v1528 = vunpack.c.l.b16 %v1272
        %v1529 = vunpack.c.l.b16 %v1273
        %v1530 = vunpack.c.l.b16 %v1274
        %v1531 = vunpack.c.l.b16 %v1275
        %v1532 = vunpack.c.l.b16 %v1276
        %v1533 = vunpack.c.l.b16 %v1277
        %v1534 = vunpack.c.l.b16 %v1278
        %v1535 = vunpack.c.l.b16 %v1279
        %v1536 = vunpack.c.l.b16 %v1280
        %v1537 = vunpack.c.l.b16 %v1281
        %v1538 = vunpack.c.l.b16 %v1282
        %v1539 = vunpack.c.l.b16 %v1283
        %v1540 = vunpack.c.l.b16 %v1284
        %v1541 = vunpack.c.l.b16 %v1285
        %v1542 = vunpack.c.l.b16 %v1286
        %v1543 = vunpack.c.l.b16 %v1287
        %v1544 = vunpack.c.l.b16 %v1288
        %v1545 = vunpack.c.l.b16 %v1289
        %v1546 = vunpack.c.l.b16 %v1290
        %v1547 = vunpack.c.l.b16 %v1291
        %v1548 = vunpack.c.l.b16 %v1292
        %v1549 = vunpack.c.l.b16 %v1293
        %v1550 = vunpack.c.l.b16 %v1294
        %v1551 = vunpack.c.l.b16 %v1295
        %v1552 = vunpack.c.l.b16 %v1296
        %v1553 = vunpack.c.l.b16 %v1297
        %v1554 = vunpack.c.l.b16 %v1298
        %v1555 = vunpack.c.l.b16 %v1299
        %v1556 = vunpack.c.l.b16 %v1300
        %v1557 = vunpack.c.l.b16 %v1301
        %v1558 = vunpack.c.l.b16 %v1302
        %v1559 = vunpack.c.l.b16 %v1303
        %v1560 = vpack.c.b16 %v1529, %v1528
        %v1561 = vpack.c.b16 %v1531, %v1530
        %v1562 = vpack.c.b16 %v1533, %v1532
        %v1563 = vpack.c.b16 %v1535, %v1534
        %v1564 = vpack.c.b16 %v1537, %v1536
        %v1565 = vpack.c.b16 %v1539, %v1538
        %v1566 = vpack.c.b16 %v1541, %v1540
        %v1567 = vpack.c.b16 %v1543, %v1542
        %v1568 = vpack.c.b16 %v1545, %v1544
        %v1569 = vpack.c.b16 %v1547, %v1546
        %v1570 = vpack.c.b16 %v1549, %v1548
        %v1571 = vpack.c.b16 %v1551, %v1550
        %v1572 = vpack.c.b16 %v1553, %v1552
        %v1573 = vpack.c.b16 %v1555, %v1554
        %v1574 = vpack.c.b16 %v1557, %v1556
        %v1575 = vpack.c.b16 %v1559, %v1558
        %1592 = vmatprep.subr.bf16.mxu0 0
        %1593 = vmatpush1.bf16.msra.mxu0 %v1264
        %1594 = vmatprep.subr.bf16.mxu0 0
        %1595 = vmatpush1.bf16.msra.mxu0 %v1265
        %1596 = vmatprep.subr.bf16.mxu0 0
        %1597 = vmatpush1.bf16.msra.mxu0 %v1266
        %1598 = vmatprep.subr.bf16.mxu0 0
        %1599 = vmatpush1.bf16.msra.mxu0 %v1267
        %1600 = vmatprep.subr.bf16.mxu0 0
        %1601 = vmatpush1.bf16.msra.mxu0 %v1268
        %1602 = vmatprep.subr.bf16.mxu0 0
        %1603 = vmatpush1.bf16.msra.mxu0 %v1269
        %1604 = vmatprep.subr.bf16.mxu0 0
        %1605 = vmatpush1.bf16.msra.mxu0 %v1270
        %1606 = vmatprep.subr.bf16.mxu0 0
        %1607 = vmatpush1.bf16.msra.mxu0 %v1271
        %1608 = vmatprep.subr.bf16.mxu0 0
        %1609 = vmatpush1.bf16.msra.mxu0 0
        %1610 = vmatprep.subr.bf16.mxu0 0
        %1611 = vmatpush1.bf16.msra.mxu0 0
        %1612 = vmatprep.subr.bf16.mxu0 0
        %1613 = vmatpush1.bf16.msra.mxu0 0
        %1614 = vmatprep.subr.bf16.mxu0 0
        %1615 = vmatpush1.bf16.msra.mxu0 0
        %1616 = vmatprep.subr.bf16.mxu0 0
        %1617 = vmatpush1.bf16.msra.mxu0 0
        %1618 = vmatprep.subr.bf16.mxu0 0
        %1619 = vmatpush1.bf16.msra.mxu0 0
        %1620 = vmatprep.subr.bf16.mxu0 0
        %1621 = vmatpush1.bf16.msra.mxu0 0
        %1622 = vmatprep.subr.bf16.mxu0 0
        %1623 = vmatpush1.bf16.msra.mxu0 0
        %1624 = vmatprep.mubr.bf16.mxu0 0
        %1625 = vmatmul.mubr.bf16.gmra.mrb[0].mxu0 %v1560
        %v1626 = vpop.f32.mrb[0].mxu0
        %v1627 = vadd.f32 %v1339, %v1626
        %v1628 = vpop.f32.mrb[0].mxu0
        %v1629 = vpop.f32.mrb[0].mxu0
        %v1630 = vadd.f32 %v1344, %v1629
        %v1631 = vpop.f32.mrb[0].mxu0
        %1632 = vmatprep.mubr.bf16.mxu0 0
        %1633 = vmatmul.mubr.bf16.gmra.mrb[0].mxu0 %v1561
        %v1634 = vpop.f32.mrb[0].mxu0
        %v1635 = vadd.f32 %v1349, %v1634
        %v1636 = vpop.f32.mrb[0].mxu0
        %v1637 = vpop.f32.mrb[0].mxu0
        %v1638 = vadd.f32 %v1354, %v1637
        %v1639 = vpop.f32.mrb[0].mxu0
        %1640 = vmatprep.mubr.bf16.mxu0 0
        %1641 = vmatmul.mubr.bf16.gmra.mrb[0].mxu0 %v1562
        %v1642 = vpop.f32.mrb[0].mxu0
        %v1643 = vadd.f32 %v1359, %v1642
        %v1644 = vpop.f32.mrb[0].mxu0
        %v1645 = vpop.f32.mrb[0].mxu0
        %v1646 = vadd.f32 %v1364, %v1645
        %v1647 = vpop.f32.mrb[0].mxu0
        %1648 = vmatprep.mubr.bf16.mxu0 0
        %1649 = vmatmul.mubr.bf16.gmra.mrb[0].mxu0 %v1563
        %v1650 = vpop.f32.mrb[0].mxu0
        %v1651 = vadd.f32 %v1369, %v1650
        %v1652 = vpop.f32.mrb[0].mxu0
        %v1653 = vpop.f32.mrb[0].mxu0
        %v1654 = vadd.f32 %v1374, %v1653
        %v1655 = vpop.f32.mrb[0].mxu0
        %1656 = vmatprep.mubr.bf16.mxu0 0
        %1657 = vmatmul.mubr.bf16.gmra.mrb[0].mxu0 %v1564
        %v1658 = vpop.f32.mrb[0].mxu0
        %v1659 = vadd.f32 %v1379, %v1658
        %v1660 = vpop.f32.mrb[0].mxu0
        %v1661 = vpop.f32.mrb[0].mxu0
        %v1662 = vadd.f32 %v1384, %v1661
        %v1663 = vpop.f32.mrb[0].mxu0
        %1664 = vmatprep.mubr.bf16.mxu0 0
        %1665 = vmatmul.mubr.bf16.gmra.mrb[0].mxu0 %v1565
        %v1666 = vpop.f32.mrb[0].mxu0
        %v1667 = vadd.f32 %v1389, %v1666
        %v1668 = vpop.f32.mrb[0].mxu0
        %v1669 = vpop.f32.mrb[0].mxu0
        %v1670 = vadd.f32 %v1394, %v1669
        %v1671 = vpop.f32.mrb[0].mxu0
        %1672 = vmatprep.mubr.bf16.mxu0 0
        %1673 = vmatmul.mubr.bf16.gmra.mrb[0].mxu0 %v1566
        %v1674 = vpop.f32.mrb[0].mxu0
        %v1675 = vadd.f32 %v1399, %v1674
        %v1676 = vpop.f32.mrb[0].mxu0
        %v1677 = vpop.f32.mrb[0].mxu0
        %v1678 = vadd.f32 %v1404, %v1677
        %v1679 = vpop.f32.mrb[0].mxu0
        %1680 = vmatprep.mubr.bf16.mxu0 0
        %1681 = vmatmul.mubr.bf16.gmra.mrb[0].mxu0 %v1567
        %v1682 = vpop.f32.mrb[0].mxu0
        %v1683 = vadd.f32 %v1409, %v1682
        %v1684 = vpop.f32.mrb[0].mxu0
        %v1685 = vpop.f32.mrb[0].mxu0
        %v1686 = vadd.f32 %v1414, %v1685
        %v1687 = vpop.f32.mrb[0].mxu0
        %1688 = vmatprep.mubr.bf16.mxu0 0
        %1689 = vmatmul.mubr.bf16.gmra.mrb[0].mxu0 %v1568
        %v1690 = vpop.f32.mrb[0].mxu0
        %v1691 = vadd.f32 %v1419, %v1690
        %v1692 = vpop.f32.mrb[0].mxu0
        %v1693 = vpop.f32.mrb[0].mxu0
        %v1694 = vadd.f32 %v1424, %v1693
        %v1695 = vpop.f32.mrb[0].mxu0
        %1696 = vmatprep.mubr.bf16.mxu0 0
        %1697 = vmatmul.mubr.bf16.gmra.mrb[0].mxu0 %v1569
        %v1698 = vpop.f32.mrb[0].mxu0
        %v1699 = vadd.f32 %v1429, %v1698
        %v1700 = vpop.f32.mrb[0].mxu0
        %v1701 = vpop.f32.mrb[0].mxu0
        %v1702 = vadd.f32 %v1434, %v1701
        %v1703 = vpop.f32.mrb[0].mxu0
        %1704 = vmatprep.mubr.bf16.mxu0 0
        %1705 = vmatmul.mubr.bf16.gmra.mrb[0].mxu0 %v1570
        %v1706 = vpop.f32.mrb[0].mxu0
        %v1707 = vadd.f32 %v1439, %v1706
        %v1708 = vpop.f32.mrb[0].mxu0
        %v1709 = vpop.f32.mrb[0].mxu0
        %v1710 = vadd.f32 %v1444, %v1709
        %v1711 = vpop.f32.mrb[0].mxu0
        %1712 = vmatprep.mubr.bf16.mxu0 0
        %1713 = vmatmul.mubr.bf16.gmra.mrb[0].mxu0 %v1571
        %v1714 = vpop.f32.mrb[0].mxu0
        %v1715 = vadd.f32 %v1449, %v1714
        %v1716 = vpop.f32.mrb[0].mxu0
        %v1717 = vpop.f32.mrb[0].mxu0
        %v1718 = vadd.f32 %v1454, %v1717
        %v1719 = vpop.f32.mrb[0].mxu0
        %1720 = vmatprep.mubr.bf16.mxu0 0
        %1721 = vmatmul.mubr.bf16.gmra.mrb[0].mxu0 %v1572
        %v1722 = vpop.f32.mrb[0].mxu0
        %v1723 = vadd.f32 %v1459, %v1722
        %v1724 = vpop.f32.mrb[0].mxu0
        %v1725 = vpop.f32.mrb[0].mxu0
        %v1726 = vadd.f32 %v1464, %v1725
        %v1727 = vpop.f32.mrb[0].mxu0
        %1728 = vmatprep.mubr.bf16.mxu0 0
        %1729 = vmatmul.mubr.bf16.gmra.mrb[0].mxu0 %v1573
        %v1730 = vpop.f32.mrb[0].mxu0
        %v1731 = vadd.f32 %v1469, %v1730
        %v1732 = vpop.f32.mrb[0].mxu0
        %v1733 = vpop.f32.mrb[0].mxu0
        %v1734 = vadd.f32 %v1474, %v1733
        %v1735 = vpop.f32.mrb[0].mxu0
        %1736 = vmatprep.mubr.bf16.mxu0 0
        %1737 = vmatmul.mubr.bf16.gmra.mrb[0].mxu0 %v1574
        %v1738 = vpop.f32.mrb[0].mxu0
        %v1739 = vadd.f32 %v1479, %v1738
        %v1740 = vpop.f32.mrb[0].mxu0
        %v1741 = vpop.f32.mrb[0].mxu0
        %v1742 = vadd.f32 %v1484, %v1741
        %v1743 = vpop.f32.mrb[0].mxu0
        %1744 = vmatprep.mubr.bf16.mxu0 0
        %1745 = vmatmul.mubr.bf16.gmra.mrb[0].mxu0 %v1575
        %v1746 = vpop.f32.mrb[0].mxu0
        %v1747 = vadd.f32 %v1489, %v1746
        %v1748 = vpop.f32.mrb[0].mxu0
        %v1749 = vpop.f32.mrb[0].mxu0
        %v1750 = vadd.f32 %v1494, %v1749
        %v1751 = vpop.f32.mrb[0].mxu0
        %1752 = vdwg.mxu0
        %v1753 = vmax.f32 %v1627, 0.0
        %v1754 = vmax.f32 %v1630, 0.0
        %v1755 = vmax.f32 %v1635, 0.0
        %v1756 = vmax.f32 %v1638, 0.0
        %v1757 = vmax.f32 %v1643, 0.0
        %v1758 = vmax.f32 %v1646, 0.0
        %v1759 = vmax.f32 %v1651, 0.0
        %v1760 = vmax.f32 %v1654, 0.0
        %v1761 = vmax.f32 %v1659, 0.0
        %v1762 = vmax.f32 %v1662, 0.0
        %v1763 = vmax.f32 %v1667, 0.0
        %v1764 = vmax.f32 %v1670, 0.0
        %v1765 = vmax.f32 %v1675, 0.0
        %v1766 = vmax.f32 %v1678, 0.0
        %v1767 = vmax.f32 %v1683, 0.0
        %v1768 = vmax.f32 %v1686, 0.0
        %v1769 = vmax.f32 %v1691, 0.0
        %v1770 = vmax.f32 %v1694, 0.0
        %v1771 = vmax.f32 %v1699, 0.0
        %v1772 = vmax.f32 %v1702, 0.0
        %v1773 = vmax.f32 %v1707, 0.0
        %v1774 = vmax.f32 %v1710, 0.0
        %v1775 = vmax.f32 %v1715, 0.0
        %v1776 = vmax.f32 %v1718, 0.0
        %v1777 = vmax.f32 %v1723, 0.0
        %v1778 = vmax.f32 %v1726, 0.0
        %v1779 = vmax.f32 %v1731, 0.0
        %v1780 = vmax.f32 %v1734, 0.0
        %v1781 = vmax.f32 %v1739, 0.0
        %v1782 = vmax.f32 %v1742, 0.0
        %v1783 = vmax.f32 %v1747, 0.0
        %v1784 = vmax.f32 %v1750, 0.0
        %v1785 = vpack.c.bf16 %v1754, %v1753
        %v1786 = vpack.c.bf16 %v1756, %v1755
        %v1787 = vpack.c.bf16 %v1758, %v1757
        %v1788 = vpack.c.bf16 %v1760, %v1759
        %v1789 = vpack.c.bf16 %v1762, %v1761
        %v1790 = vpack.c.bf16 %v1764, %v1763
        %v1791 = vpack.c.bf16 %v1766, %v1765
        %v1792 = vpack.c.bf16 %v1768, %v1767
        %v1793 = vpack.c.bf16 %v1770, %v1769
        %v1794 = vpack.c.bf16 %v1772, %v1771
        %v1795 = vpack.c.bf16 %v1774, %v1773
        %v1796 = vpack.c.bf16 %v1776, %v1775
        %v1797 = vpack.c.bf16 %v1778, %v1777
        %v1798 = vpack.c.bf16 %v1780, %v1779
        %v1799 = vpack.c.bf16 %v1782, %v1781
        %v1800 = vpack.c.bf16 %v1784, %v1783
        %v1817 = vunpack.c.l.b16 %v1785
        %v1818 = vunpack.c.h.b16 %v1785
        %v1819 = vunpack.c.l.b16 %v1786
        %v1820 = vunpack.c.h.b16 %v1786
        %v1821 = vunpack.c.l.b16 %v1787
        %v1822 = vunpack.c.h.b16 %v1787
        %v1823 = vunpack.c.l.b16 %v1788
        %v1824 = vunpack.c.h.b16 %v1788
        %v1825 = vunpack.c.l.b16 %v1789
        %v1826 = vunpack.c.h.b16 %v1789
        %v1827 = vunpack.c.l.b16 %v1790
        %v1828 = vunpack.c.h.b16 %v1790
        %v1829 = vunpack.c.l.b16 %v1791
        %v1830 = vunpack.c.h.b16 %v1791
        %v1831 = vunpack.c.l.b16 %v1792
        %v1832 = vunpack.c.h.b16 %v1792
        %v1833 = vunpack.c.l.b16 %v1793
        %v1834 = vunpack.c.h.b16 %v1793
        %v1835 = vunpack.c.l.b16 %v1794
        %v1836 = vunpack.c.h.b16 %v1794
        %v1837 = vunpack.c.l.b16 %v1795
        %v1838 = vunpack.c.h.b16 %v1795
        %v1839 = vunpack.c.l.b16 %v1796
        %v1840 = vunpack.c.h.b16 %v1796
        %v1841 = vunpack.c.l.b16 %v1797
        %v1842 = vunpack.c.h.b16 %v1797
        %v1843 = vunpack.c.l.b16 %v1798
        %v1844 = vunpack.c.h.b16 %v1798
        %v1845 = vunpack.c.l.b16 %v1799
        %v1846 = vunpack.c.h.b16 %v1799
        %v1847 = vunpack.c.l.b16 %v1800
        %v1848 = vunpack.c.h.b16 %v1800
        %v1849 = vpack.c.b16 %v1817, %v1817
        %v1850 = vpack.c.b16 %v1818, %v1818
        %v1851 = vpack.c.b16 %v1819, %v1819
        %v1852 = vpack.c.b16 %v1820, %v1820
        %v1853 = vpack.c.b16 %v1821, %v1821
        %v1854 = vpack.c.b16 %v1822, %v1822
        %v1855 = vpack.c.b16 %v1823, %v1823
        %v1856 = vpack.c.b16 %v1824, %v1824
        %v1857 = vpack.c.b16 %v1825, %v1825
        %v1858 = vpack.c.b16 %v1826, %v1826
        %v1859 = vpack.c.b16 %v1827, %v1827
        %v1860 = vpack.c.b16 %v1828, %v1828
        %v1861 = vpack.c.b16 %v1829, %v1829
        %v1862 = vpack.c.b16 %v1830, %v1830
        %v1863 = vpack.c.b16 %v1831, %v1831
        %v1864 = vpack.c.b16 %v1832, %v1832
        %v1865 = vpack.c.b16 %v1833, %v1833
        %v1866 = vpack.c.b16 %v1834, %v1834
        %v1867 = vpack.c.b16 %v1835, %v1835
        %v1868 = vpack.c.b16 %v1836, %v1836
        %v1869 = vpack.c.b16 %v1837, %v1837
        %v1870 = vpack.c.b16 %v1838, %v1838
        %v1871 = vpack.c.b16 %v1839, %v1839
        %v1872 = vpack.c.b16 %v1840, %v1840
        %v1873 = vpack.c.b16 %v1841, %v1841
        %v1874 = vpack.c.b16 %v1842, %v1842
        %v1875 = vpack.c.b16 %v1843, %v1843
        %v1876 = vpack.c.b16 %v1844, %v1844
        %v1877 = vpack.c.b16 %v1845, %v1845
        %v1878 = vpack.c.b16 %v1846, %v1846
        %v1879 = vpack.c.b16 %v1847, %v1847
        %v1880 = vpack.c.b16 %v1848, %v1848
        %1913 = vst [vmem:[%s401] sm:$0xf] %v1849
        %1914 = vst [vmem:[%s401 + $0x4] sm:$0xf] %v1850
        %1915 = vst [vmem:[%s401 + $0x8] sm:$0xf] %v1851
        %1916 = vst [vmem:[%s401 + $0xc] sm:$0xf] %v1852
        %1917 = vst [vmem:[%s401 + $0x10] sm:$0xf] %v1853
        %1918 = vst [vmem:[%s401 + $0x14] sm:$0xf] %v1854
        %1919 = vst [vmem:[%s401 + $0x18] sm:$0xf] %v1855
        %1920 = vst [vmem:[%s401 + $0x1c] sm:$0xf] %v1856
        %1921 = vst [vmem:[%s401 + $0x20] sm:$0xf] %v1857
        %1922 = vst [vmem:[%s401 + $0x24] sm:$0xf] %v1858
        %1923 = vst [vmem:[%s401 + $0x28] sm:$0xf] %v1859
        %1924 = vst [vmem:[%s401 + $0x2c] sm:$0xf] %v1860
        %1925 = vst [vmem:[%s401 + $0x30] sm:$0xf] %v1861
        %1926 = vst [vmem:[%s401 + $0x34] sm:$0xf] %v1862
        %1927 = vst [vmem:[%s401 + $0x38] sm:$0xf] %v1863
        %1928 = vst [vmem:[%s401 + $0x3c] sm:$0xf] %v1864
        %1929 = vst [vmem:[%s401 + $0x40] sm:$0xf] %v1865
        %1930 = vst [vmem:[%s401 + $0x44] sm:$0xf] %v1866
        %1931 = vst [vmem:[%s401 + $0x48] sm:$0xf] %v1867
        %1932 = vst [vmem:[%s401 + $0x4c] sm:$0xf] %v1868
        %1933 = vst [vmem:[%s401 + $0x50] sm:$0xf] %v1869
        %1934 = vst [vmem:[%s401 + $0x54] sm:$0xf] %v1870
        %1935 = vst [vmem:[%s401 + $0x58] sm:$0xf] %v1871
        %1936 = vst [vmem:[%s401 + $0x5c] sm:$0xf] %v1872
        %1937 = vst [vmem:[%s401 + $0x60] sm:$0xf] %v1873
        %1938 = vst [vmem:[%s401 + $0x64] sm:$0xf] %v1874
        %1939 = vst [vmem:[%s401 + $0x68] sm:$0xf] %v1875
        %1940 = vst [vmem:[%s401 + $0x6c] sm:$0xf] %v1876
        %1941 = vst [vmem:[%s401 + $0x70] sm:$0xf] %v1877
        %1942 = vst [vmem:[%s401 + $0x74] sm:$0xf] %v1878
        %1943 = vst [vmem:[%s401 + $0x78] sm:$0xf] %v1879
        %1944 = vst [vmem:[%s401 + $0x7c] sm:$0xf] %v1880
        %s1945 = sand.u32 %s285, 1
        %s1946 = scalar_lea.sflag [#allocation3], %s1945
        %s1947 = sand.u32 %s285, 1
        %s1948 = smul.addr %s1947, 128
        %s1949 = scalar_lea.vmem [#allocation2], %s1948
        // Predicated region
        $region65: #{tpu_custom_call.1} parent=63 // pred_check
          %p1950 = pneg %p295
        $region66: #{tpu_custom_call.1} parent=63 // pred_check_branch
          %1952 = sbr.rel (%p1950) target = $region68
        $region67: #{tpu_custom_call.1} parent=63 // pred_region
          %s1954 = ssub.s32 2048, 2048
          %1955 = vsyncadd %s1946, %s1954
          %s1956 = smul.addr %s29, 64
          %s1957 = sadd.s32 %s30, %s1956
          %s1958 = smul.addr %s1957, 64
          %s1959 = scalar_lea.hbm %s11, %s1958
          %s1960 = sshll.u32 %s1949, 4
          %s1961 = int_to_ptr.vmem [resolvable:$true] %s1960
          %1966 = dma.vmem_to_hbm [thread:$0]  %s1961, 2048, %s1959, %s1946, 64, 128, 4
        $region68: #{tpu_custom_call.1} parent=63 // pred_fallthru
          _
      $region64: #{tpu_custom_call.1} parent=5 // pred_fallthru
        _
      %p1967 = scmp.le.s32.totalorder 2, %s20
      // Predicated region
      $region69: #{tpu_custom_call.1} parent=5 // pred_check
        %p1968 = pneg %p1967
      $region70: #{tpu_custom_call.1} parent=5 // pred_check_branch
        %1970 = sbr.rel (%p1968) target = $region72
      $region71: #{tpu_custom_call.1} parent=5 // pred_region
        %s1971 = ssub.s32 %s20, 2
        // Predicated region
        $region73: #{tpu_custom_call.1} parent=71 // pred_check
          %p1972 = pneg %p301
        $region74: #{tpu_custom_call.1} parent=71 // pred_check_branch
          %1974 = sbr.rel (%p1972) target = $region76
        $region75: #{tpu_custom_call.1} parent=71 // pred_region
          %s1975 = sand.u32 %s286, 1
          %s1976 = scalar_lea.sflag [#allocation3], %s1975
          %s1977 = sand.u32 %s286, 1
          %s1978 = smul.addr %s1977, 128
          %s1979 = scalar_lea.vmem [#allocation2], %s1978
          %1980 = dma.done %s1976, 2048
        $region76: #{tpu_custom_call.1} parent=71 // pred_fallthru
          _
      $region72: #{tpu_custom_call.1} parent=5 // pred_fallthru
        _
    $region6: #{tpu_custom_call.1} parent=1 // loop_footer
      %s24 = sadd.s32 1, %s20
    $region7: #{tpu_custom_call.1} parent=1 // loop_footer_branch
      %19 = sbr.rel target = $region3
    $region8: #{tpu_custom_call.1} parent=1 // loop_exit
      _
    %1981 = vsyncpa [#allocation3], 1
    %s1982 = scalar_lea.sflag [#allocation3], 1
    %1983 = vsyncpa %s1982, 1

</llo_original>
